<compile_context>
chip_gen: v5e
topology: v5e:2x2
jax: 0.10.0
libtpu: 0.0.40
codegen_flags: <defaults>
</compile_context>

<pallas_src>
import functools

import jax
import jax.numpy as jnp
from jax import lax
from jax.experimental import pallas as pl
from jax.experimental.pallas import tpu as pltpu

EPS = 1e-5


def _round_up(a, b):
    return ((a + b - 1) // b) * b


# ------------------------------ Pallas kernel ------------------------------- #

def _conv_bn_kernel(*refs, tap_offsets, rows, has_add, relu):
    """One output image per grid step.

    refs = (src_0..src_{G-1}, w_0..w_{G-1}, b, [add], out)
      src_g : (1, R_g, Cin_g)               bf16 flattened (phase-decomposed, padded) activation
      w_g   : (n_taps_g, Cin_g, Cout_pad)   bf16 BN-folded per-tap weight matrices
      b     : (1, Cout_pad)                 f32 folded bias
      add   : (1, rows, Cout_pad)           f32 identity-shortcut term (optional)
      out   : (1, rows, Cout_pad)
    Each conv tap is ONE contiguous-row 2-D matmul (no im2col, no reshapes, no scratch).
    """
    g = len(tap_offsets)
    src_refs = refs[:g]
    w_refs = refs[g:2 * g]
    b_ref = refs[2 * g]
    add_ref = refs[2 * g + 1] if has_add else None
    o_ref = refs[-1]

    acc = None
    for s_ref, w_ref, offs in zip(src_refs, w_refs, tap_offsets):
        for ti, t0 in enumerate(offs):
            slab = s_ref[0, t0:t0 + rows, :]                       # (rows, Cin_g) bf16
            part = jnp.dot(slab, w_ref[ti],
                           preferred_element_type=jnp.float32)     # (rows, Cout_pad) f32
            acc = part if acc is None else acc + part

    y = acc + b_ref[...]
    if has_add:
        y = y + add_ref[0]                                         # identity shortcut (epilogue)
    if relu:
        y = jnp.maximum(y, 0.0)
    o_ref[0] = y.astype(o_ref.dtype)                               # single lane-dense store


def _conv_bn_pallas(sources, tap_offsets, weights, bias, rows, add=None, relu=True,
                    out_dtype=jnp.float32):
    """relu_maybe( sum_g sum_taps dot(tap_slab_g, w_tap_g) + bias [+ add] ), one image/step."""
    N = sources[0].shape[0]
    cout_pad = weights[0].shape[-1]

    in_specs = []
    args = []
    for s in sources:
        in_specs.append(pl.BlockSpec((1,) + tuple(s.shape[1:]), lambda n: (n, 0, 0)))
        args.append(s)
    for w in weights:
        in_specs.append(pl.BlockSpec(tuple(w.shape), lambda n: (0, 0, 0)))
        args.append(w)
    in_specs.append(pl.BlockSpec(tuple(bias.shape), lambda n: (0, 0)))
    args.append(bias)
    if add is not None:
        in_specs.append(pl.BlockSpec((1,) + tuple(add.shape[1:]), lambda n: (n, 0, 0)))
        args.append(add)

    kernel = functools.partial(_conv_bn_kernel, tap_offsets=tap_offsets, rows=rows,
                               has_add=add is not None, relu=relu)

    flops = 2 * N * rows * sum(int(w.shape[0]) * int(w.shape[1]) for w in weights) * cout_pad
    bytes_accessed = (sum(int(a.size) * a.dtype.itemsize for a in args)
                      + N * rows * cout_pad * jnp.dtype(out_dtype).itemsize)

    return pl.pallas_call(
        kernel,
        out_shape=jax.ShapeDtypeStruct((N, rows, cout_pad), out_dtype),
        grid=(N,),
        in_specs=in_specs,
        out_specs=pl.BlockSpec((1, rows, cout_pad), lambda n: (n, 0, 0)),
        compiler_params=pltpu.CompilerParams(
            dimension_semantics=("parallel",),
            vmem_limit_bytes=32 * 1024 * 1024),
        cost_estimate=pl.CostEstimate(flops=flops, transcendentals=0,
                                      bytes_accessed=bytes_accessed),
    )(*args)


# ------------------------------- glue (JAX) --------------------------------- #

def _flatten_phases(x_nhwc, ksize, stride):
    """Phase-decompose + flatten the padded activation for per-tap contiguous-row matmuls.

    Returns (xflat (N, R, C), tap_offsets[9], rows, Ho, Wo, Wph).  For tap t = (kh, kw) the
    value needed by output (h, w) sits at flat row tap_offsets[t] + h*Wph + w, for every
    h < Ho, w < Wo.  Rows with w in [Wo, Wph) are junk and get sliced off by the caller.
    Total HBM footprint ~1x the activation (no im2col blowup).
    """
    N, H, W, C = x_nhwc.shape
    pad = (ksize - 1) // 2
    Ho = (H + 2 * pad - ksize) // stride + 1
    Wo = (W + 2 * pad - ksize) // stride + 1
    off = (ksize - 1) // stride
    Hph, Wph = Ho + off, Wo + off

    xp = jnp.pad(x_nhwc, ((0, 0), (pad, pad), (pad, pad), (0, 0)))
    phases = []
    for p in range(stride):
        for q in range(stride):
            ph = xp[:, p::stride, q::stride, :][:, :Hph, :Wph, :]
            ph = jnp.pad(ph, ((0, 0), (0, Hph - ph.shape[1]), (0, Wph - ph.shape[2]), (0, 0)))
            phases.append(ph.reshape(N, Hph * Wph, C))
    xflat = jnp.concatenate(phases, axis=1) if len(phases) > 1 else phases[0]

    rows = Ho * Wph
    tap_offsets = []
    for kh in range(ksize):
        for kw in range(ksize):
            pidx = (kh % stride) * stride + (kw % stride)
            tap_offsets.append(pidx * (Hph * Wph) + (kh // stride) * Wph + (kw // stride))

    need = max(tap_offsets) + rows                     # keep every tap slab in bounds
    if need > xflat.shape[1]:
        xflat = jnp.pad(xflat, ((0, 0), (0, need - xflat.shape[1]), (0, 0)))
    return xflat, tap_offsets, rows, Ho, Wo, Wph


def _taps_from_oihw(w_oihw, scale, cout_pad):
    """torch (Cout, Cin, kh, kw) -> (kh*kw, Cin, Cout_pad) bf16, BN scale folded in."""
    co, ci, kh, kw = w_oihw.shape
    w = jnp.transpose(w_oihw, (2, 3, 1, 0)).reshape(kh * kw, ci, co)
    w = w * scale[None, None, :]
    w = jnp.pad(w, ((0, 0), (0, 0), (0, cout_pad - co)))
    return w.astype(jnp.bfloat16)


def _fold_bn(gamma, beta, mean, var):
    scale = gamma / jnp.sqrt(var + EPS)
    return scale, beta - mean * scale


def init_basic_block(key, c_in, c_out, stride):
    ks = jax.random.split(key, 12)
    p = {
        "w1": 0.2 * jax.random.normal(ks[0], (c_out, c_in, 3, 3), jnp.float32),
        "g1": 1.0 + 0.1 * jax.random.normal(ks[1], (c_out,), jnp.float32),
        "b1": 0.1 * jax.random.normal(ks[2], (c_out,), jnp.float32),
        "m1": 0.05 * jax.random.normal(ks[3], (c_out,), jnp.float32),
        "v1": 0.9 + 0.1 * jnp.abs(jax.random.normal(ks[4], (c_out,), jnp.float32)),
        "w2": 0.2 * jax.random.normal(ks[5], (c_out, c_out, 3, 3), jnp.float32),
        "g2": 1.0 + 0.1 * jax.random.normal(ks[6], (c_out,), jnp.float32),
        "b2": 0.1 * jax.random.normal(ks[7], (c_out,), jnp.float32),
        "m2": 0.05 * jax.random.normal(ks[8], (c_out,), jnp.float32),
        "v2": 0.9 + 0.1 * jnp.abs(jax.random.normal(ks[9], (c_out,), jnp.float32)),
    }
    if stride != 1 or c_in != c_out:
        p["ws"] = 0.2 * jax.random.normal(ks[10], (c_out, c_in, 1, 1), jnp.float32)
        kss = jax.random.split(ks[11], 4)
        p["gs"] = 1.0 + 0.1 * jax.random.normal(kss[0], (c_out,), jnp.float32)
        p["bs"] = 0.1 * jax.random.normal(kss[1], (c_out,), jnp.float32)
        p["ms"] = 0.05 * jax.random.normal(kss[2], (c_out,), jnp.float32)
        p["vs"] = 0.9 + 0.1 * jnp.abs(jax.random.normal(kss[3], (c_out,), jnp.float32))
    return p


def basic_block_forward(params, x_nchw, stride):
    x = jnp.transpose(x_nchw, (0, 2, 3, 1))                  # NCHW -> NHWC
    N, H, W, Cin = x.shape
    Cout = params["w1"].shape[0]
    Cout_pad = _round_up(Cout, 128)
    xb = x.astype(jnp.bfloat16)

    # ---- conv1 (3x3, stride) + BN1 + ReLU : fused pallas_call #1 ----
    s1, b1 = _fold_bn(params["g1"], params["b1"], params["m1"], params["v1"])
    w1 = _taps_from_oihw(params["w1"], s1, Cout_pad)                     # (9, Cin, Cout_pad)
    xf1, offs1, rows1, Ho, Wo, Wph1 = _flatten_phases(xb, 3, stride)
    b1p = jnp.pad(b1, (0, Cout_pad - Cout)).reshape(1, Cout_pad).astype(jnp.float32)
    y1 = _conv_bn_pallas([xf1], [offs1], [w1], b1p, rows1,
                         add=None, relu=True, out_dtype=jnp.bfloat16)
    y1 = y1.reshape(N, Ho, Wph1, Cout_pad)[:, :, :Wo, :Cout]             # (N,Ho,Wo,Cout) bf16

    # ---- conv2 (3x3, s=1) + BN2 + shortcut + final ReLU : fused pallas_call #2 ----
    s2, b2 = _fold_bn(params["g2"], params["b2"], params["m2"], params["v2"])
    w2 = _taps_from_oihw(params["w2"], s2, Cout_pad)                     # (9, Cout, Cout_pad)
    xf2, offs2, rows2, Ho2, Wo2, Wph2 = _flatten_phases(y1, 3, 1)        # Ho2==Ho, Wo2==Wo
    sources, tap_offsets, weights = [xf2], [offs2], [w2]
    add = None
    if "ws" in params:
        # projection shortcut (1x1 conv + BN): one extra tap-matmul in the same accumulation
        ss, bs = _fold_bn(params["gs"], params["bs"], params["ms"], params["vs"])
        ws = _taps_from_oihw(params["ws"], ss, Cout_pad)                 # (1, Cin, Cout_pad)
        xs = xb[:, ::stride, ::stride, :][:, :Ho, :Wo, :]
        xs = jnp.pad(xs, ((0, 0), (0, 0), (0, Wph2 - Wo), (0, 0))).reshape(N, Ho * Wph2, Cin)
        sources.append(xs)
        tap_offsets.append([0])
        weights.append(ws)
        bias2 = b2 + bs
    else:
        # identity shortcut: free epilogue add (no eye-matmul)
        add = jnp.pad(x, ((0, 0), (0, 0), (0, Wph2 - Wo), (0, Cout_pad - Cout)))
        add = add.reshape(N, Ho * Wph2, Cout_pad).astype(jnp.float32)
        bias2 = b2
    b2p = jnp.pad(bias2, (0, Cout_pad - Cout)).reshape(1, Cout_pad).astype(jnp.float32)
    out = _conv_bn_pallas(sources, tap_offsets, weights, b2p, rows2,
                          add=add, relu=True, out_dtype=jnp.float32)
    out = out.reshape(N, Ho, Wph2, Cout_pad)[:, :, :Wo, :Cout]

    return jnp.transpose(out, (0, 3, 1, 2))                              # back to NCHW


# ---------------------------- pure-JAX reference ----------------------------- #

def _ref_conv(x, w, stride, pad):
    return lax.conv_general_dilated(
        x, w, window_strides=(stride, stride), padding=((pad, pad), (pad, pad)),
        dimension_numbers=("NCHW", "OIHW", "NCHW"))


def _ref_bn(x, g, b, m, v):
    return (x - m[None, :, None, None]) / jnp.sqrt(v + EPS)[None, :, None, None] \
        * g[None, :, None, None] + b[None, :, None, None]


def ref_forward(params, x, stride):
    y = _ref_conv(x, params["w1"], stride, 1)
    y = jnp.maximum(_ref_bn(y, params["g1"], params["b1"], params["m1"], params["v1"]), 0.0)
    y = _ref_conv(y, params["w2"], 1, 1)
    y = _ref_bn(y, params["g2"], params["b2"], params["m2"], params["v2"])
    if "ws" in params:
        s = _ref_conv(x, params["ws"], stride, 0)
        s = _ref_bn(s, params["gs"], params["bs"], params["ms"], params["vs"])
    else:
        s = x
    return jnp.maximum(y + s, 0.0)


# ----------------------------------- main ------------------------------------ #

if __name__ == "__main__":
    key = jax.random.PRNGKey(0)

    configs = [
        (2, 4, 8, 16, 16, 2),   # projection-shortcut path (stride 2, Cin != Cout)
        (2, 8, 8, 16, 16, 1),   # identity-shortcut path (stride 1, Cin == Cout) -> epilogue add
    ]

    # The kernel feeds the MXU bf16 operands; quantize the conv operands for BOTH the kernel
    # path and the f32 reference so the comparison is apples-to-apples (the remaining tolerance
    # covers the bf16 intermediate handoff and accumulation-order differences).
    q = lambda a: a.astype(jnp.bfloat16).astype(jnp.float32)

    for idx, (N, C_IN, C_OUT, H, W, STRIDE) in enumerate(configs):
        k_x, k_p = jax.random.split(jax.random.fold_in(key, idx))
        x = q(jax.random.normal(k_x, (N, C_IN, H, W), jnp.float32))
        params = init_basic_block(k_p, C_IN, C_OUT, STRIDE)
        for name in ("w1", "w2", "ws"):
            if name in params:
                params[name] = q(params[name])

        fwd = jax.jit(functools.partial(basic_block_forward, stride=STRIDE))
        out = jax.block_until_ready(fwd(params, x))
        ref = jax.block_until_ready(ref_forward(params, x, STRIDE))

        Ho = (H - 1) // STRIDE + 1
        Wo = (W - 1) // STRIDE + 1
        assert out.shape == ref.shape == (N, C_OUT, Ho, Wo), (out.shape, ref.shape)
        max_err = float(jnp.max(jnp.abs(out - ref)))
        assert jnp.allclose(out, ref, rtol=5e-2, atol=5e-2), \
            f"config {idx}: mismatch vs reference, max|err|={max_err}"

    print("KERNEL_OK")
</pallas_src>

<mosaic_0001>
module attributes {stable_mosaic.version = 11 : i64} {
  func.func @_conv_bn_kernel(%arg0: i32, %arg1: memref<1x324x4xbf16, #tpu.memory_space<vmem>>, %arg2: memref<9x4x128xbf16, #tpu.memory_space<vmem>>, %arg3: memref<1x128xf32, #tpu.memory_space<vmem>>, %arg4: memref<1x72x128xbf16, #tpu.memory_space<vmem>>) attributes {dimension_semantics = [#tpu.dimension_semantics<parallel>], iteration_bounds = array<i64: 2>, scalar_prefetch = 0 : i64, scratch_operands = 0 : i64, tpu.core_type = #tpu.core_type<tc>, window_params = [{transform_indices = @transform_0, window_bounds = array<i64: 1, 324, 4>}, {pipeline_mode = #tpu.pipeline_mode<synchronous>, transform_indices = @transform_1, window_bounds = array<i64: 9, 4, 128>}, {pipeline_mode = #tpu.pipeline_mode<synchronous>, transform_indices = @transform_2, window_bounds = array<i64: 1, 128>}, {transform_indices = @transform_3, window_bounds = array<i64: 1, 72, 128>}]} {
    %c0 = arith.constant 0 : index
    %c0_0 = arith.constant 0 : index
    %c0_1 = arith.constant 0 : index
    %0 = vector.load %arg1[%c0, %c0_0, %c0_1] : memref<1x324x4xbf16, #tpu.memory_space<vmem>>, vector<1x72x4xbf16>
    %1 = vector.shape_cast %0 : vector<1x72x4xbf16> to vector<72x4xbf16>
    %c0_2 = arith.constant 0 : index
    %c0_3 = arith.constant 0 : index
    %c0_4 = arith.constant 0 : index
    %2 = vector.load %arg2[%c0_2, %c0_3, %c0_4] : memref<9x4x128xbf16, #tpu.memory_space<vmem>>, vector<1x4x128xbf16>
    %3 = vector.shape_cast %2 : vector<1x4x128xbf16> to vector<4x128xbf16>
    %cst = arith.constant dense<0.000000e+00> : vector<72x128xf32>
    %4 = tpu.matmul %1, %3, %cst {dimension_numbers = #tpu.dot_dimension_numbers<[1], [0], [0], [1], [0, 0, 1, 1], [], []>} : vector<72x4xbf16>, vector<4x128xbf16>, vector<72x128xf32> -> vector<72x128xf32>
    %c0_5 = arith.constant 0 : index
    %c81 = arith.constant 81 : index
    %c0_6 = arith.constant 0 : index
    %5 = vector.load %arg1[%c0_5, %c81, %c0_6] : memref<1x324x4xbf16, #tpu.memory_space<vmem>>, vector<1x72x4xbf16>
    %6 = vector.shape_cast %5 : vector<1x72x4xbf16> to vector<72x4xbf16>
    %c1 = arith.constant 1 : index
    %c0_7 = arith.constant 0 : index
    %c0_8 = arith.constant 0 : index
    %7 = vector.load %arg2[%c1, %c0_7, %c0_8] : memref<9x4x128xbf16, #tpu.memory_space<vmem>>, vector<1x4x128xbf16>
    %8 = vector.shape_cast %7 : vector<1x4x128xbf16> to vector<4x128xbf16>
    %cst_9 = arith.constant dense<0.000000e+00> : vector<72x128xf32>
    %9 = tpu.matmul %6, %8, %cst_9 {dimension_numbers = #tpu.dot_dimension_numbers<[1], [0], [0], [1], [0, 0, 1, 1], [], []>} : vector<72x4xbf16>, vector<4x128xbf16>, vector<72x128xf32> -> vector<72x128xf32>
    %10 = arith.addf %4, %9 : vector<72x128xf32>
    %c0_10 = arith.constant 0 : index
    %c1_11 = arith.constant 1 : index
    %c0_12 = arith.constant 0 : index
    %11 = vector.load %arg1[%c0_10, %c1_11, %c0_12] : memref<1x324x4xbf16, #tpu.memory_space<vmem>>, vector<1x72x4xbf16>
    %12 = vector.shape_cast %11 : vector<1x72x4xbf16> to vector<72x4xbf16>
    %c2 = arith.constant 2 : index
    %c0_13 = arith.constant 0 : index
    %c0_14 = arith.constant 0 : index
    %13 = vector.load %arg2[%c2, %c0_13, %c0_14] : memref<9x4x128xbf16, #tpu.memory_space<vmem>>, vector<1x4x128xbf16>
    %14 = vector.shape_cast %13 : vector<1x4x128xbf16> to vector<4x128xbf16>
    %cst_15 = arith.constant dense<0.000000e+00> : vector<72x128xf32>
    %15 = tpu.matmul %12, %14, %cst_15 {dimension_numbers = #tpu.dot_dimension_numbers<[1], [0], [0], [1], [0, 0, 1, 1], [], []>} : vector<72x4xbf16>, vector<4x128xbf16>, vector<72x128xf32> -> vector<72x128xf32>
    %16 = arith.addf %10, %15 : vector<72x128xf32>
    %c0_16 = arith.constant 0 : index
    %c162 = arith.constant 162 : index
    %c0_17 = arith.constant 0 : index
    %17 = vector.load %arg1[%c0_16, %c162, %c0_17] : memref<1x324x4xbf16, #tpu.memory_space<vmem>>, vector<1x72x4xbf16>
    %18 = vector.shape_cast %17 : vector<1x72x4xbf16> to vector<72x4xbf16>
    %c3 = arith.constant 3 : index
    %c0_18 = arith.constant 0 : index
    %c0_19 = arith.constant 0 : index
    %19 = vector.load %arg2[%c3, %c0_18, %c0_19] : memref<9x4x128xbf16, #tpu.memory_space<vmem>>, vector<1x4x128xbf16>
    %20 = vector.shape_cast %19 : vector<1x4x128xbf16> to vector<4x128xbf16>
    %cst_20 = arith.constant dense<0.000000e+00> : vector<72x128xf32>
    %21 = tpu.matmul %18, %20, %cst_20 {dimension_numbers = #tpu.dot_dimension_numbers<[1], [0], [0], [1], [0, 0, 1, 1], [], []>} : vector<72x4xbf16>, vector<4x128xbf16>, vector<72x128xf32> -> vector<72x128xf32>
    %22 = arith.addf %16, %21 : vector<72x128xf32>
    %c0_21 = arith.constant 0 : index
    %c243 = arith.constant 243 : index
    %c0_22 = arith.constant 0 : index
    %23 = vector.load %arg1[%c0_21, %c243, %c0_22] : memref<1x324x4xbf16, #tpu.memory_space<vmem>>, vector<1x72x4xbf16>
    %24 = vector.shape_cast %23 : vector<1x72x4xbf16> to vector<72x4xbf16>
    %c4 = arith.constant 4 : index
    %c0_23 = arith.constant 0 : index
    %c0_24 = arith.constant 0 : index
    %25 = vector.load %arg2[%c4, %c0_23, %c0_24] : memref<9x4x128xbf16, #tpu.memory_space<vmem>>, vector<1x4x128xbf16>
    %26 = vector.shape_cast %25 : vector<1x4x128xbf16> to vector<4x128xbf16>
    %cst_25 = arith.constant dense<0.000000e+00> : vector<72x128xf32>
    %27 = tpu.matmul %24, %26, %cst_25 {dimension_numbers = #tpu.dot_dimension_numbers<[1], [0], [0], [1], [0, 0, 1, 1], [], []>} : vector<72x4xbf16>, vector<4x128xbf16>, vector<72x128xf32> -> vector<72x128xf32>
    %28 = arith.addf %22, %27 : vector<72x128xf32>
    %c0_26 = arith.constant 0 : index
    %c163 = arith.constant 163 : index
    %c0_27 = arith.constant 0 : index
    %29 = vector.load %arg1[%c0_26, %c163, %c0_27] : memref<1x324x4xbf16, #tpu.memory_space<vmem>>, vector<1x72x4xbf16>
    %30 = vector.shape_cast %29 : vector<1x72x4xbf16> to vector<72x4xbf16>
    %c5 = arith.constant 5 : index
    %c0_28 = arith.constant 0 : index
    %c0_29 = arith.constant 0 : index
    %31 = vector.load %arg2[%c5, %c0_28, %c0_29] : memref<9x4x128xbf16, #tpu.memory_space<vmem>>, vector<1x4x128xbf16>
    %32 = vector.shape_cast %31 : vector<1x4x128xbf16> to vector<4x128xbf16>
    %cst_30 = arith.constant dense<0.000000e+00> : vector<72x128xf32>
    %33 = tpu.matmul %30, %32, %cst_30 {dimension_numbers = #tpu.dot_dimension_numbers<[1], [0], [0], [1], [0, 0, 1, 1], [], []>} : vector<72x4xbf16>, vector<4x128xbf16>, vector<72x128xf32> -> vector<72x128xf32>
    %34 = arith.addf %28, %33 : vector<72x128xf32>
    %c0_31 = arith.constant 0 : index
    %c9 = arith.constant 9 : index
    %c0_32 = arith.constant 0 : index
    %35 = vector.load %arg1[%c0_31, %c9, %c0_32] : memref<1x324x4xbf16, #tpu.memory_space<vmem>>, vector<1x72x4xbf16>
    %36 = vector.shape_cast %35 : vector<1x72x4xbf16> to vector<72x4xbf16>
    %c6 = arith.constant 6 : index
    %c0_33 = arith.constant 0 : index
    %c0_34 = arith.constant 0 : index
    %37 = vector.load %arg2[%c6, %c0_33, %c0_34] : memref<9x4x128xbf16, #tpu.memory_space<vmem>>, vector<1x4x128xbf16>
    %38 = vector.shape_cast %37 : vector<1x4x128xbf16> to vector<4x128xbf16>
    %cst_35 = arith.constant dense<0.000000e+00> : vector<72x128xf32>
    %39 = tpu.matmul %36, %38, %cst_35 {dimension_numbers = #tpu.dot_dimension_numbers<[1], [0], [0], [1], [0, 0, 1, 1], [], []>} : vector<72x4xbf16>, vector<4x128xbf16>, vector<72x128xf32> -> vector<72x128xf32>
    %40 = arith.addf %34, %39 : vector<72x128xf32>
    %c0_36 = arith.constant 0 : index
    %c90 = arith.constant 90 : index
    %c0_37 = arith.constant 0 : index
    %41 = vector.load %arg1[%c0_36, %c90, %c0_37] : memref<1x324x4xbf16, #tpu.memory_space<vmem>>, vector<1x72x4xbf16>
    %42 = vector.shape_cast %41 : vector<1x72x4xbf16> to vector<72x4xbf16>
    %c7 = arith.constant 7 : index
    %c0_38 = arith.constant 0 : index
    %c0_39 = arith.constant 0 : index
    %43 = vector.load %arg2[%c7, %c0_38, %c0_39] : memref<9x4x128xbf16, #tpu.memory_space<vmem>>, vector<1x4x128xbf16>
    %44 = vector.shape_cast %43 : vector<1x4x128xbf16> to vector<4x128xbf16>
    %cst_40 = arith.constant dense<0.000000e+00> : vector<72x128xf32>
    %45 = tpu.matmul %42, %44, %cst_40 {dimension_numbers = #tpu.dot_dimension_numbers<[1], [0], [0], [1], [0, 0, 1, 1], [], []>} : vector<72x4xbf16>, vector<4x128xbf16>, vector<72x128xf32> -> vector<72x128xf32>
    %46 = arith.addf %40, %45 : vector<72x128xf32>
    %c0_41 = arith.constant 0 : index
    %c10 = arith.constant 10 : index
    %c0_42 = arith.constant 0 : index
    %47 = vector.load %arg1[%c0_41, %c10, %c0_42] : memref<1x324x4xbf16, #tpu.memory_space<vmem>>, vector<1x72x4xbf16>
    %48 = vector.shape_cast %47 : vector<1x72x4xbf16> to vector<72x4xbf16>
    %c8 = arith.constant 8 : index
    %c0_43 = arith.constant 0 : index
    %c0_44 = arith.constant 0 : index
    %49 = vector.load %arg2[%c8, %c0_43, %c0_44] : memref<9x4x128xbf16, #tpu.memory_space<vmem>>, vector<1x4x128xbf16>
    %50 = vector.shape_cast %49 : vector<1x4x128xbf16> to vector<4x128xbf16>
    %cst_45 = arith.constant dense<0.000000e+00> : vector<72x128xf32>
    %51 = tpu.matmul %48, %50, %cst_45 {dimension_numbers = #tpu.dot_dimension_numbers<[1], [0], [0], [1], [0, 0, 1, 1], [], []>} : vector<72x4xbf16>, vector<4x128xbf16>, vector<72x128xf32> -> vector<72x128xf32>
    %52 = arith.addf %46, %51 : vector<72x128xf32>
    %c0_46 = arith.constant 0 : index
    %c0_47 = arith.constant 0 : index
    %53 = vector.load %arg3[%c0_46, %c0_47] : memref<1x128xf32, #tpu.memory_space<vmem>>, vector<1x128xf32>
    %54 = vector.broadcast %53 : vector<1x128xf32> to vector<72x128xf32>
    %55 = arith.addf %52, %54 : vector<72x128xf32>
    %cst_48 = arith.constant 0.000000e+00 : f32
    %56 = vector.broadcast %cst_48 : f32 to vector<72x128xf32>
    %57 = arith.maximumf %55, %56 : vector<72x128xf32>
    %58 = arith.truncf %57 : vector<72x128xf32> to vector<72x128xbf16>
    %c0_49 = arith.constant 0 : index
    %c0_50 = arith.constant 0 : index
    %c0_51 = arith.constant 0 : index
    %59 = vector.load %arg4[%c0_49, %c0_50, %c0_51] : memref<1x72x128xbf16, #tpu.memory_space<vmem>>, vector<1x72x128xbf16>
    %60 = vector.shape_cast %59 : vector<1x72x128xbf16> to vector<72x128xbf16>
    %61 = vector.shape_cast %58 : vector<72x128xbf16> to vector<1x72x128xbf16>
    tpu.vector_store %arg4[%c0_49, %c0_50, %c0_51], %61 {strides = array<i32>} : memref<1x72x128xbf16, #tpu.memory_space<vmem>>, vector<1x72x128xbf16>,
    return
  }
  func.func @transform_0(%arg0: i32) -> (i32, i32, i32) {
    %c0_i32 = arith.constant 0 : i32
    %c0_i32_0 = arith.constant 0 : i32
    %c0_i32_1 = arith.constant 0 : i32
    return %arg0, %c0_i32, %c0_i32_0 : i32, i32, i32
  }
  func.func @transform_1(%arg0: i32) -> (i32, i32, i32) {
    %c0_i32 = arith.constant 0 : i32
    %c0_i32_0 = arith.constant 0 : i32
    %c0_i32_1 = arith.constant 0 : i32
    %c0_i32_2 = arith.constant 0 : i32
    return %c0_i32, %c0_i32_0, %c0_i32_1 : i32, i32, i32
  }
  func.func @transform_2(%arg0: i32) -> (i32, i32) {
    %c0_i32 = arith.constant 0 : i32
    %c0_i32_0 = arith.constant 0 : i32
    %c0_i32_1 = arith.constant 0 : i32
    return %c0_i32, %c0_i32_0 : i32, i32
  }
  func.func @transform_3(%arg0: i32) -> (i32, i32, i32) {
    %c0_i32 = arith.constant 0 : i32
    %c0_i32_0 = arith.constant 0 : i32
    %c0_i32_1 = arith.constant 0 : i32
    return %arg0, %c0_i32, %c0_i32_0 : i32, i32, i32
  }
}

module attributes {stable_mosaic.version = 11 : i64} {
  func.func @_conv_bn_kernel(%arg0: i32, %arg1: memref<1x102x8xbf16, #tpu.memory_space<vmem>>, %arg2: memref<1x80x4xbf16, #tpu.memory_space<vmem>>, %arg3: memref<9x8x128xbf16, #tpu.memory_space<vmem>>, %arg4: memref<1x4x128xbf16, #tpu.memory_space<vmem>>, %arg5: memref<1x128xf32, #tpu.memory_space<vmem>>, %arg6: memref<1x80x128xf32, #tpu.memory_space<vmem>>) attributes {dimension_semantics = [#tpu.dimension_semantics<parallel>], iteration_bounds = array<i64: 2>, scalar_prefetch = 0 : i64, scratch_operands = 0 : i64, tpu.core_type = #tpu.core_type<tc>, window_params = [{transform_indices = @transform_0, window_bounds = array<i64: 1, 102, 8>}, {transform_indices = @transform_1, window_bounds = array<i64: 1, 80, 4>}, {pipeline_mode = #tpu.pipeline_mode<synchronous>, transform_indices = @transform_2, window_bounds = array<i64: 9, 8, 128>}, {pipeline_mode = #tpu.pipeline_mode<synchronous>, transform_indices = @transform_3, window_bounds = array<i64: 1, 4, 128>}, {pipeline_mode = #tpu.pipeline_mode<synchronous>, transform_indices = @transform_4, window_bounds = array<i64: 1, 128>}, {transform_indices = @transform_5, window_bounds = array<i64: 1, 80, 128>}]} {
    %c0 = arith.constant 0 : index
    %c0_0 = arith.constant 0 : index
    %c0_1 = arith.constant 0 : index
    %0 = vector.load %arg1[%c0, %c0_0, %c0_1] : memref<1x102x8xbf16, #tpu.memory_space<vmem>>, vector<1x80x8xbf16>
    %1 = vector.shape_cast %0 : vector<1x80x8xbf16> to vector<80x8xbf16>
    %c0_2 = arith.constant 0 : index
    %c0_3 = arith.constant 0 : index
    %c0_4 = arith.constant 0 : index
    %2 = vector.load %arg3[%c0_2, %c0_3, %c0_4] : memref<9x8x128xbf16, #tpu.memory_space<vmem>>, vector<1x8x128xbf16>
    %3 = vector.shape_cast %2 : vector<1x8x128xbf16> to vector<8x128xbf16>
    %cst = arith.constant dense<0.000000e+00> : vector<80x128xf32>
    %4 = tpu.matmul %1, %3, %cst {dimension_numbers = #tpu.dot_dimension_numbers<[1], [0], [0], [1], [0, 0, 1, 1], [], []>} : vector<80x8xbf16>, vector<8x128xbf16>, vector<80x128xf32> -> vector<80x128xf32>
    %c0_5 = arith.constant 0 : index
    %c1 = arith.constant 1 : index
    %c0_6 = arith.constant 0 : index
    %5 = vector.load %arg1[%c0_5, %c1, %c0_6] : memref<1x102x8xbf16, #tpu.memory_space<vmem>>, vector<1x80x8xbf16>
    %6 = vector.shape_cast %5 : vector<1x80x8xbf16> to vector<80x8xbf16>
    %c1_7 = arith.constant 1 : index
    %c0_8 = arith.constant 0 : index
    %c0_9 = arith.constant 0 : index
    %7 = vector.load %arg3[%c1_7, %c0_8, %c0_9] : memref<9x8x128xbf16, #tpu.memory_space<vmem>>, vector<1x8x128xbf16>
    %8 = vector.shape_cast %7 : vector<1x8x128xbf16> to vector<8x128xbf16>
    %cst_10 = arith.constant dense<0.000000e+00> : vector<80x128xf32>
    %9 = tpu.matmul %6, %8, %cst_10 {dimension_numbers = #tpu.dot_dimension_numbers<[1], [0], [0], [1], [0, 0, 1, 1], [], []>} : vector<80x8xbf16>, vector<8x128xbf16>, vector<80x128xf32> -> vector<80x128xf32>
    %10 = arith.addf %4, %9 : vector<80x128xf32>
    %c0_11 = arith.constant 0 : index
    %c2 = arith.constant 2 : index
    %c0_12 = arith.constant 0 : index
    %11 = vector.load %arg1[%c0_11, %c2, %c0_12] : memref<1x102x8xbf16, #tpu.memory_space<vmem>>, vector<1x80x8xbf16>
    %12 = vector.shape_cast %11 : vector<1x80x8xbf16> to vector<80x8xbf16>
    %c2_13 = arith.constant 2 : index
    %c0_14 = arith.constant 0 : index
    %c0_15 = arith.constant 0 : index
    %13 = vector.load %arg3[%c2_13, %c0_14, %c0_15] : memref<9x8x128xbf16, #tpu.memory_space<vmem>>, vector<1x8x128xbf16>
    %14 = vector.shape_cast %13 : vector<1x8x128xbf16> to vector<8x128xbf16>
    %cst_16 = arith.constant dense<0.000000e+00> : vector<80x128xf32>
    %15 = tpu.matmul %12, %14, %cst_16 {dimension_numbers = #tpu.dot_dimension_numbers<[1], [0], [0], [1], [0, 0, 1, 1], [], []>} : vector<80x8xbf16>, vector<8x128xbf16>, vector<80x128xf32> -> vector<80x128xf32>
    %16 = arith.addf %10, %15 : vector<80x128xf32>
    %c0_17 = arith.constant 0 : index
    %c10 = arith.constant 10 : index
    %c0_18 = arith.constant 0 : index
    %17 = vector.load %arg1[%c0_17, %c10, %c0_18] : memref<1x102x8xbf16, #tpu.memory_space<vmem>>, vector<1x80x8xbf16>
    %18 = vector.shape_cast %17 : vector<1x80x8xbf16> to vector<80x8xbf16>
    %c3 = arith.constant 3 : index
    %c0_19 = arith.constant 0 : index
    %c0_20 = arith.constant 0 : index
    %19 = vector.load %arg3[%c3, %c0_19, %c0_20] : memref<9x8x128xbf16, #tpu.memory_space<vmem>>, vector<1x8x128xbf16>
    %20 = vector.shape_cast %19 : vector<1x8x128xbf16> to vector<8x128xbf16>
    %cst_21 = arith.constant dense<0.000000e+00> : vector<80x128xf32>
    %21 = tpu.matmul %18, %20, %cst_21 {dimension_numbers = #tpu.dot_dimension_numbers<[1], [0], [0], [1], [0, 0, 1, 1], [], []>} : vector<80x8xbf16>, vector<8x128xbf16>, vector<80x128xf32> -> vector<80x128xf32>
    %22 = arith.addf %16, %21 : vector<80x128xf32>
    %c0_22 = arith.constant 0 : index
    %c11 = arith.constant 11 : index
    %c0_23 = arith.constant 0 : index
    %23 = vector.load %arg1[%c0_22, %c11, %c0_23] : memref<1x102x8xbf16, #tpu.memory_space<vmem>>, vector<1x80x8xbf16>
    %24 = vector.shape_cast %23 : vector<1x80x8xbf16> to vector<80x8xbf16>
    %c4 = arith.constant 4 : index
    %c0_24 = arith.constant 0 : index
    %c0_25 = arith.constant 0 : index
    %25 = vector.load %arg3[%c4, %c0_24, %c0_25] : memref<9x8x128xbf16, #tpu.memory_space<vmem>>, vector<1x8x128xbf16>
    %26 = vector.shape_cast %25 : vector<1x8x128xbf16> to vector<8x128xbf16>
    %cst_26 = arith.constant dense<0.000000e+00> : vector<80x128xf32>
    %27 = tpu.matmul %24, %26, %cst_26 {dimension_numbers = #tpu.dot_dimension_numbers<[1], [0], [0], [1], [0, 0, 1, 1], [], []>} : vector<80x8xbf16>, vector<8x128xbf16>, vector<80x128xf32> -> vector<80x128xf32>
    %28 = arith.addf %22, %27 : vector<80x128xf32>
    %c0_27 = arith.constant 0 : index
    %c12 = arith.constant 12 : index
    %c0_28 = arith.constant 0 : index
    %29 = vector.load %arg1[%c0_27, %c12, %c0_28] : memref<1x102x8xbf16, #tpu.memory_space<vmem>>, vector<1x80x8xbf16>
    %30 = vector.shape_cast %29 : vector<1x80x8xbf16> to vector<80x8xbf16>
    %c5 = arith.constant 5 : index
    %c0_29 = arith.constant 0 : index
    %c0_30 = arith.constant 0 : index
    %31 = vector.load %arg3[%c5, %c0_29, %c0_30] : memref<9x8x128xbf16, #tpu.memory_space<vmem>>, vector<1x8x128xbf16>
    %32 = vector.shape_cast %31 : vector<1x8x128xbf16> to vector<8x128xbf16>
    %cst_31 = arith.constant dense<0.000000e+00> : vector<80x128xf32>
    %33 = tpu.matmul %30, %32, %cst_31 {dimension_numbers = #tpu.dot_dimension_numbers<[1], [0], [0], [1], [0, 0, 1, 1], [], []>} : vector<80x8xbf16>, vector<8x128xbf16>, vector<80x128xf32> -> vector<80x128xf32>
    %34 = arith.addf %28, %33 : vector<80x128xf32>
    %c0_32 = arith.constant 0 : index
    %c20 = arith.constant 20 : index
    %c0_33 = arith.constant 0 : index
    %35 = vector.load %arg1[%c0_32, %c20, %c0_33] : memref<1x102x8xbf16, #tpu.memory_space<vmem>>, vector<1x80x8xbf16>
    %36 = vector.shape_cast %35 : vector<1x80x8xbf16> to vector<80x8xbf16>
    %c6 = arith.constant 6 : index
    %c0_34 = arith.constant 0 : index
    %c0_35 = arith.constant 0 : index
    %37 = vector.load %arg3[%c6, %c0_34, %c0_35] : memref<9x8x128xbf16, #tpu.memory_space<vmem>>, vector<1x8x128xbf16>
    %38 = vector.shape_cast %37 : vector<1x8x128xbf16> to vector<8x128xbf16>
    %cst_36 = arith.constant dense<0.000000e+00> : vector<80x128xf32>
    %39 = tpu.matmul %36, %38, %cst_36 {dimension_numbers = #tpu.dot_dimension_numbers<[1], [0], [0], [1], [0, 0, 1, 1], [], []>} : vector<80x8xbf16>, vector<8x128xbf16>, vector<80x128xf32> -> vector<80x128xf32>
    %40 = arith.addf %34, %39 : vector<80x128xf32>
    %c0_37 = arith.constant 0 : index
    %c21 = arith.constant 21 : index
    %c0_38 = arith.constant 0 : index
    %41 = vector.load %arg1[%c0_37, %c21, %c0_38] : memref<1x102x8xbf16, #tpu.memory_space<vmem>>, vector<1x80x8xbf16>
    %42 = vector.shape_cast %41 : vector<1x80x8xbf16> to vector<80x8xbf16>
    %c7 = arith.constant 7 : index
    %c0_39 = arith.constant 0 : index
    %c0_40 = arith.constant 0 : index
    %43 = vector.load %arg3[%c7, %c0_39, %c0_40] : memref<9x8x128xbf16, #tpu.memory_space<vmem>>, vector<1x8x128xbf16>
    %44 = vector.shape_cast %43 : vector<1x8x128xbf16> to vector<8x128xbf16>
    %cst_41 = arith.constant dense<0.000000e+00> : vector<80x128xf32>
    %45 = tpu.matmul %42, %44, %cst_41 {dimension_numbers = #tpu.dot_dimension_numbers<[1], [0], [0], [1], [0, 0, 1, 1], [], []>} : vector<80x8xbf16>, vector<8x128xbf16>, vector<80x128xf32> -> vector<80x128xf32>
    %46 = arith.addf %40, %45 : vector<80x128xf32>
    %c0_42 = arith.constant 0 : index
    %c22 = arith.constant 22 : index
    %c0_43 = arith.constant 0 : index
    %47 = vector.load %arg1[%c0_42, %c22, %c0_43] : memref<1x102x8xbf16, #tpu.memory_space<vmem>>, vector<1x80x8xbf16>
    %48 = vector.shape_cast %47 : vector<1x80x8xbf16> to vector<80x8xbf16>
    %c8 = arith.constant 8 : index
    %c0_44 = arith.constant 0 : index
    %c0_45 = arith.constant 0 : index
    %49 = vector.load %arg3[%c8, %c0_44, %c0_45] : memref<9x8x128xbf16, #tpu.memory_space<vmem>>, vector<1x8x128xbf16>
    %50 = vector.shape_cast %49 : vector<1x8x128xbf16> to vector<8x128xbf16>
    %cst_46 = arith.constant dense<0.000000e+00> : vector<80x128xf32>
    %51 = tpu.matmul %48, %50, %cst_46 {dimension_numbers = #tpu.dot_dimension_numbers<[1], [0], [0], [1], [0, 0, 1, 1], [], []>} : vector<80x8xbf16>, vector<8x128xbf16>, vector<80x128xf32> -> vector<80x128xf32>
    %52 = arith.addf %46, %51 : vector<80x128xf32>
    %c0_47 = arith.constant 0 : index
    %c0_48 = arith.constant 0 : index
    %c0_49 = arith.constant 0 : index
    %53 = vector.load %arg2[%c0_47, %c0_48, %c0_49] : memref<1x80x4xbf16, #tpu.memory_space<vmem>>, vector<1x80x4xbf16>
    %54 = vector.shape_cast %53 : vector<1x80x4xbf16> to vector<80x4xbf16>
    %c0_50 = arith.constant 0 : index
    %c0_51 = arith.constant 0 : index
    %c0_52 = arith.constant 0 : index
    %55 = vector.load %arg4[%c0_50, %c0_51, %c0_52] : memref<1x4x128xbf16, #tpu.memory_space<vmem>>, vector<1x4x128xbf16>
    %56 = vector.shape_cast %55 : vector<1x4x128xbf16> to vector<4x128xbf16>
    %cst_53 = arith.constant dense<0.000000e+00> : vector<80x128xf32>
    %57 = tpu.matmul %54, %56, %cst_53 {dimension_numbers = #tpu.dot_dimension_numbers<[1], [0], [0], [1], [0, 0, 1, 1], [], []>} : vector<80x4xbf16>, vector<4x128xbf16>, vector<80x128xf32> -> vector<80x128xf32>
    %58 = arith.addf %52, %57 : vector<80x128xf32>
    %c0_54 = arith.constant 0 : index
    %c0_55 = arith.constant 0 : index
    %59 = vector.load %arg5[%c0_54, %c0_55] : memref<1x128xf32, #tpu.memory_space<vmem>>, vector<1x128xf32>
    %60 = vector.broadcast %59 : vector<1x128xf32> to vector<80x128xf32>
    %61 = arith.addf %58, %60 : vector<80x128xf32>
    %cst_56 = arith.constant 0.000000e+00 : f32
    %62 = vector.broadcast %cst_56 : f32 to vector<80x128xf32>
    %63 = arith.maximumf %61, %62 : vector<80x128xf32>
    %c0_57 = arith.constant 0 : index
    %c0_58 = arith.constant 0 : index
    %c0_59 = arith.constant 0 : index
    %64 = vector.load %arg6[%c0_57, %c0_58, %c0_59] : memref<1x80x128xf32, #tpu.memory_space<vmem>>, vector<1x80x128xf32>
    %65 = vector.shape_cast %64 : vector<1x80x128xf32> to vector<80x128xf32>
    %66 = vector.shape_cast %63 : vector<80x128xf32> to vector<1x80x128xf32>
    tpu.vector_store %arg6[%c0_57, %c0_58, %c0_59], %66 {strides = array<i32>} : memref<1x80x128xf32, #tpu.memory_space<vmem>>, vector<1x80x128xf32>,
    return
  }
  func.func @transform_0(%arg0: i32) -> (i32, i32, i32) {
    %c0_i32 = arith.constant 0 : i32
    %c0_i32_0 = arith.constant 0 : i32
    %c0_i32_1 = arith.constant 0 : i32
    return %arg0, %c0_i32, %c0_i32_0 : i32, i32, i32
  }
  func.func @transform_1(%arg0: i32) -> (i32, i32, i32) {
    %c0_i32 = arith.constant 0 : i32
    %c0_i32_0 = arith.constant 0 : i32
    %c0_i32_1 = arith.constant 0 : i32
    return %arg0, %c0_i32, %c0_i32_0 : i32, i32, i32
  }
  func.func @transform_2(%arg0: i32) -> (i32, i32, i32) {
    %c0_i32 = arith.constant 0 : i32
    %c0_i32_0 = arith.constant 0 : i32
    %c0_i32_1 = arith.constant 0 : i32
    %c0_i32_2 = arith.constant 0 : i32
    return %c0_i32, %c0_i32_0, %c0_i32_1 : i32, i32, i32
  }
  func.func @transform_3(%arg0: i32) -> (i32, i32, i32) {
    %c0_i32 = arith.constant 0 : i32
    %c0_i32_0 = arith.constant 0 : i32
    %c0_i32_1 = arith.constant 0 : i32
    %c0_i32_2 = arith.constant 0 : i32
    return %c0_i32, %c0_i32_0, %c0_i32_1 : i32, i32, i32
  }
  func.func @transform_4(%arg0: i32) -> (i32, i32) {
    %c0_i32 = arith.constant 0 : i32
    %c0_i32_0 = arith.constant 0 : i32
    %c0_i32_1 = arith.constant 0 : i32
    return %c0_i32, %c0_i32_0 : i32, i32
  }
  func.func @transform_5(%arg0: i32) -> (i32, i32, i32) {
    %c0_i32 = arith.constant 0 : i32
    %c0_i32_0 = arith.constant 0 : i32
    %c0_i32_1 = arith.constant 0 : i32
    return %arg0, %c0_i32, %c0_i32_0 : i32, i32, i32
  }
}

</mosaic_0001>

<llo_original>
// kernel: basic_block_forward.2
$region0: #{basic_block_forward.2}
  #allocation0 [shape = 'u32[]', space=smem, size = 0x4, offset = 0x4, fixed_abs, tag = 'smem constant byte address 0x4 - core index']
  #allocation1 [shape = 'u32[72,128]{1,0:T(1,128)}', space=vmem, size = 0x9000, scoped, tag = 'internal scratch']
  %s0 = inlined_call_operand.vmem [shape: bf16[2,324,4], index: 0, kind: input, shape index: {}]
  %s1 = inlined_call_operand.vmem [shape: bf16[9,4,128], index: 1, kind: input, shape index: {}]
  %s2 = inlined_call_operand.vmem [shape: f32[1,128], index: 2, kind: input, shape index: {}]
  %s3 = inlined_call_operand.vmem [shape: bf16[2,72,128], index: 3, kind: output, shape index: {}]
  %s4 = sld [smem:[#allocation0]]
  $region45: #{basic_block_forward.2} parent=0
    _
  %s6 = ssub.s32 1, %s4
  %s7 = scalar_select 0, %s6, %s4
  loop: start=0, step=1, limit=4
  $region2: #{basic_block_forward.2} parent=0 // loop_pre_header
    _
  $region3: #{basic_block_forward.2} parent=0 // loop_header
    %s9 = sphi 0, %s13
    %p10 = scmp.ge.s32.totalorder %s9, 4
    %s19 = sphi 0, %s21
    %s22 = sphi 0, %s19
    %s23 = sphi 0, %s22
    %s39 = sphi 0, %s23
    %s43 = sphi 0, %s43
    %s45 = sphi 0, %s43
    %s46 = sphi 0, %s45
    %s60 = sphi 0, %s46
    %s64 = sphi 0, %s64
    %s66 = sphi 0, %s64
    %s67 = sphi 0, %s66
    %s81 = sphi 0, %s67
    %s87 = sphi 0, %s89
    %s90 = sphi 0, %s87
    %s91 = sphi 0, %s90
    %s107 = sphi 0, %s91
  $region4: #{basic_block_forward.2} parent=0 // loop_header_branch
    %12 = sbr.rel (%p10) target = $region8
  $region5: #{basic_block_forward.2} parent=0 // loop_body
    %s14 = ssub.s32 %s9, 1
    %s15 = ssub.s32 %s9, 2
    %s16 = sadd.s32 %s9, 1
    %s17 = ssub.s32 %s9, %s16
    %p18 = scmp.eq.s32.totalorder %s17, 0
    %s20 = sadd.s32 %s19, 1
    %s21 = scalar_select %p18, %s19, %s20
    %p24 = pneg %p18
    %p25 = scmp.eq.s32.totalorder %s9, 1
    %p26 = por %p24, %p25
    %p27 = scmp.ne.s32.totalorder %s19, %s22
    %p28 = scmp.eq.s32.totalorder %s9, 0
    %p29 = por %p27, %p28
    %p30 = scmp.ne.s32.totalorder %s19, %s22
    %p31 = scmp.eq.s32.totalorder %s14, 1
    %p32 = por %p30, %p31
    %p33 = scmp.ne.s32.totalorder %s22, %s23
    %p34 = scmp.eq.s32.totalorder %s14, 0
    %p35 = por %p33, %p34
    %p36 = scmp.ne.s32.totalorder %s22, %s23
    %p37 = scmp.eq.s32.totalorder %s15, 1
    %p38 = por %p36, %p37
    %p40 = scmp.ne.s32.totalorder %s23, %s39
    %p41 = scmp.eq.s32.totalorder %s15, 0
    %p42 = por %p40, %p41
    %s44 = sadd.s32 %s43, 1
    %p47 = scmp.eq.s32.totalorder %s9, 1
    %p48 = scmp.ne.s32.totalorder %s43, %s45
    %p49 = scmp.eq.s32.totalorder %s9, 0
    %p50 = por %p48, %p49
    %p51 = scmp.ne.s32.totalorder %s43, %s45
    %p52 = scmp.eq.s32.totalorder %s14, 1
    %p53 = por %p51, %p52
    %p54 = scmp.ne.s32.totalorder %s45, %s46
    %p55 = scmp.eq.s32.totalorder %s14, 0
    %p56 = por %p54, %p55
    %p57 = scmp.ne.s32.totalorder %s45, %s46
    %p58 = scmp.eq.s32.totalorder %s15, 1
    %p59 = por %p57, %p58
    %p61 = scmp.ne.s32.totalorder %s46, %s60
    %p62 = scmp.eq.s32.totalorder %s15, 0
    %p63 = por %p61, %p62
    %s65 = sadd.s32 %s64, 1
    %p68 = scmp.eq.s32.totalorder %s9, 1
    %p69 = scmp.ne.s32.totalorder %s64, %s66
    %p70 = scmp.eq.s32.totalorder %s9, 0
    %p71 = por %p69, %p70
    %p72 = scmp.ne.s32.totalorder %s64, %s66
    %p73 = scmp.eq.s32.totalorder %s14, 1
    %p74 = por %p72, %p73
    %p75 = scmp.ne.s32.totalorder %s66, %s67
    %p76 = scmp.eq.s32.totalorder %s14, 0
    %p77 = por %p75, %p76
    %p78 = scmp.ne.s32.totalorder %s66, %s67
    %p79 = scmp.eq.s32.totalorder %s15, 1
    %p80 = por %p78, %p79
    %p82 = scmp.ne.s32.totalorder %s67, %s81
    %p83 = scmp.eq.s32.totalorder %s15, 0
    %p84 = por %p82, %p83
    %s85 = ssub.s32 %s9, %s16
    %p86 = scmp.eq.s32.totalorder %s85, 0
    %s88 = sadd.s32 %s87, 1
    %s89 = scalar_select %p86, %s87, %s88
    %p92 = pneg %p86
    %p93 = scmp.eq.s32.totalorder %s9, 1
    %p94 = por %p92, %p93
    %p95 = scmp.ne.s32.totalorder %s87, %s90
    %p96 = scmp.eq.s32.totalorder %s9, 0
    %p97 = por %p95, %p96
    %p98 = scmp.ne.s32.totalorder %s87, %s90
    %p99 = scmp.eq.s32.totalorder %s14, 1
    %p100 = por %p98, %p99
    %p101 = scmp.ne.s32.totalorder %s90, %s91
    %p102 = scmp.eq.s32.totalorder %s14, 0
    %p103 = por %p101, %p102
    %p104 = scmp.ne.s32.totalorder %s90, %s91
    %p105 = scmp.eq.s32.totalorder %s15, 1
    %p106 = por %p104, %p105
    %p108 = scmp.ne.s32.totalorder %s91, %s107
    %p109 = scmp.eq.s32.totalorder %s15, 0
    %p110 = por %p108, %p109
    %p111 = scmp.le.s32.totalorder 1, %s9
    %p112 = scmp.lt.s32.totalorder %s9, 3
    %p113 = pnand %p111, %p112
    %p114 = pneg %p113
    // Predicated region
    $region9: #{basic_block_forward.2} parent=5 // pred_check
      _
    $region10: #{basic_block_forward.2} parent=5 // pred_check_branch
      %116 = sbr.rel (%p113) target = $region12
    $region11: #{basic_block_forward.2} parent=5 // pred_region
      %s117 = ssub.s32 %s9, 1
      // Predicated region
      $region13: #{basic_block_forward.2} parent=11 // pred_check
        %p118 = pneg %p56
      $region14: #{basic_block_forward.2} parent=11 // pred_check_branch
        %120 = sbr.rel (%p118) target = $region16
      $region15: #{basic_block_forward.2} parent=11 // pred_region
        _
      $region16: #{basic_block_forward.2} parent=11 // pred_fallthru
        _
      // Predicated region
      $region17: #{basic_block_forward.2} parent=11 // pred_check
        %p121 = pneg %p77
      $region18: #{basic_block_forward.2} parent=11 // pred_check_branch
        %123 = sbr.rel (%p121) target = $region20
      $region19: #{basic_block_forward.2} parent=11 // pred_region
        _
      $region20: #{basic_block_forward.2} parent=11 // pred_fallthru
        _
    $region12: #{basic_block_forward.2} parent=5 // pred_fallthru
      _
    %p124 = scmp.lt.s32.totalorder %s9, 2
    // Predicated region
    $region21: #{basic_block_forward.2} parent=5 // pred_check
      %p125 = pneg %p124
    $region22: #{basic_block_forward.2} parent=5 // pred_check_branch
      %127 = sbr.rel (%p125) target = $region24
    $region23: #{basic_block_forward.2} parent=5 // pred_region
      // Predicated region
      $region25: #{basic_block_forward.2} parent=23 // pred_check
        %p128 = pneg %p29
      $region26: #{basic_block_forward.2} parent=23 // pred_check_branch
        %130 = sbr.rel (%p128) target = $region28
      $region27: #{basic_block_forward.2} parent=23 // pred_region
        %p131 = scmp.lt.s32.totalorder %s9, 1
        %s132 = scalar_select %p131, %s9, 1
        %s133 = smul.addr %s132, 41
        %s134 = smul.addr %s133, 4
        %s135 = scalar_lea.vmem %s0, %s134
      $region28: #{basic_block_forward.2} parent=23 // pred_fallthru
        _
    $region24: #{basic_block_forward.2} parent=5 // pred_fallthru
      _
    %p136 = scmp.le.s32.totalorder 1, %s9
    %p137 = scmp.lt.s32.totalorder %s9, 3
    %p138 = pnand %p136, %p137
    %p139 = pneg %p138
    // Predicated region
    $region29: #{basic_block_forward.2} parent=5 // pred_check
      _
    $region30: #{basic_block_forward.2} parent=5 // pred_check_branch
      %141 = sbr.rel (%p138) target = $region32
    $region31: #{basic_block_forward.2} parent=5 // pred_region
      %s142 = ssub.s32 %s9, 1
      %p143 = scmp.lt.s32.totalorder %s14, 1
      %s144 = scalar_select %p143, %s14, 1
      %s145 = smul.addr %s144, 41
      %s146 = smul.addr %s145, 4
      %s147 = scalar_lea.vmem %s0, %s146
      %p148 = pneg %p35
      %p149 = pneg %p32
      %p150 = pneg %p56
      %p151 = pneg %p53
      %p152 = pneg %p77
      %p153 = pneg %p74
      %p154 = pneg %p103
      %p155 = pneg %p100
      %p156 = scmp.lt.s32.totalorder %s14, 1
      %s157 = scalar_select %p156, %s14, 1
      %s158 = smul.addr %s157, 9
      %s159 = smul.addr %s158, 4
      %s160 = scalar_lea.vmem %s3, %s159
      %p161 = scmp.lt.s32.totalorder %s14, 1
      %s162 = scalar_select %p161, %s14, 1
      %s163 = smul.addr %s162, 41
      %s164 = smul.addr %s163, 4
      %s165 = scalar_lea.vmem %s0, %s164
      %p166 = scmp.lt.s32.totalorder %s14, 1
      %s167 = scalar_select %p166, %s14, 1
      %s168 = smul.addr %s167, 9
      %s169 = smul.addr %s168, 4
      %s170 = scalar_lea.vmem %s3, %s169
      %v172 = vld [vmem:[%s165] sm:$0xf]
      %v173 = vld [vmem:[%s165 + $0x4] sm:$0xf]
      %v174 = vld [vmem:[%s165 + $0x8] sm:$0xf]
      %v175 = vld [vmem:[%s165 + $0xc] sm:$0xf]
      %v176 = vld [vmem:[%s165 + $0x10] sm:$0xf]
      %v177 = vld [vmem:[%s165 + $0x14] sm:$0xf]
      %v178 = vld [vmem:[%s165 + $0x18] sm:$0xf]
      %v179 = vld [vmem:[%s165 + $0x1c] sm:$0xf]
      %v180 = vld [vmem:[%s165 + $0x20] sm:$0xf]
      %v181 = vld [vmem:[%s1] sm:$0x3]
      %v182 = vld [vmem:[%s165 + $0x28] sm:$0xf]
      %v183 = vld [vmem:[%s165 + $0x2c] sm:$0xf]
      %v184 = vld [vmem:[%s165 + $0x30] sm:$0xf]
      %v185 = vld [vmem:[%s165 + $0x34] sm:$0xf]
      %v186 = vld [vmem:[%s165 + $0x38] sm:$0xf]
      %v187 = vld [vmem:[%s165 + $0x3c] sm:$0xf]
      %v188 = vld [vmem:[%s165 + $0x40] sm:$0xf]
      %v189 = vld [vmem:[%s165 + $0x44] sm:$0xf]
      %v190 = vld [vmem:[%s165 + $0x48] sm:$0xf]
      %v191 = vld [vmem:[%s165 + $0x4c] sm:$0x1]
      %s192 = scalar_lea.vmem %s1, 2
      %v193 = vld [vmem:[%s192] sm:$0x3]
      %v204 = vunpack.c.l.b16 %v182
      %v205 = vunpack.c.l.b16 %v183
      %v206 = vunpack.c.l.b16 %v184
      %v207 = vunpack.c.l.b16 %v185
      %v208 = vunpack.c.l.b16 %v186
      %v209 = vunpack.c.l.b16 %v187
      %v210 = vunpack.c.l.b16 %v188
      %v211 = vunpack.c.l.b16 %v189
      %v212 = vunpack.c.l.b16 %v190
      %v213 = vunpack.c.l.b16 %v191
      %v214 = vpack.c.b16 %v205, %v204
      %v215 = vpack.c.b16 %v207, %v206
      %v216 = vpack.c.b16 %v209, %v208
      %v217 = vpack.c.b16 %v211, %v210
      %v218 = vpack.c.b16 %v213, %v212
      %vm219 = vsmask.f32 7424
      %v221 = vshrl.u32 %v214, 16
      %v223 = vshll.u32 %v214, 16
      %v225 = vrot.slane %v223, 1
      %v226 = vor.u32 %v221, %v225
      %v228 = vshll.u32 %v215, 16
      %v230 = vrot.slane %v228, 1
      %v231 = vsel %vm219, %v226, %v230
      %v232 = vshrl.u32 %v215, 16
      %v234 = vor.u32 %v232, %v230
      %v236 = vshll.u32 %v216, 16
      %v238 = vrot.slane %v236, 1
      %v239 = vsel %vm219, %v234, %v238
      %v240 = vshrl.u32 %v216, 16
      %v242 = vor.u32 %v240, %v238
      %v244 = vshll.u32 %v217, 16
      %v246 = vrot.slane %v244, 1
      %v247 = vsel %vm219, %v242, %v246
      %v248 = vshrl.u32 %v217, 16
      %v250 = vor.u32 %v248, %v246
      %v252 = vshll.u32 %v218, 16
      %v254 = vrot.slane %v252, 1
      %v255 = vsel %vm219, %v250, %v254
      %v256 = vshrl.u32 %v218, 16
      %v258 = vor.u32 %v256, %v254
      %vm259 = vcmask 31744
      %v261 = vsel %vm259, %v231, 0
      %v264 = vsel %vm259, %v239, 0
      %v267 = vsel %vm259, %v247, 0
      %v270 = vsel %vm259, %v255, 0
      %v273 = vsel %vm259, %v258, 0
      %vm275 = vcmask 1041408
      %v277 = vsel %vm275, %v193, 0
      %279 = vmatpush.bf16.msra.mxu0 0
      %280 = vmatpush.bf16.msra.mxu0 0
      %281 = vmatpush.bf16.msra.mxu0 0
      %282 = vmatpush.bf16.msra.mxu0 0
      %283 = vmatpush.bf16.msra.mxu0 0
      %284 = vmatpush.bf16.msra.mxu0 0
      %285 = vmatpush.bf16.msra.mxu0 0
      %286 = vmatpush.bf16.msra.mxu0 %v277
      %287 = vmatmul.bf16.gmra.mxu0 %v261
      %v288 = vpop.f32.mrf.mxu0
      %v289 = vadd.f32 0.0, %v288
      %v290 = vpop.f32.mrf.mxu0
      %v291 = vadd.f32 0.0, %v290
      %292 = vmatmul.bf16.gmra.mxu0 %v264
      %v293 = vpop.f32.mrf.mxu0
      %v294 = vadd.f32 0.0, %v293
      %v295 = vpop.f32.mrf.mxu0
      %v296 = vadd.f32 0.0, %v295
      %297 = vmatmul.bf16.gmra.mxu0 %v267
      %v298 = vpop.f32.mrf.mxu0
      %v299 = vadd.f32 0.0, %v298
      %v300 = vpop.f32.mrf.mxu0
      %v301 = vadd.f32 0.0, %v300
      %302 = vmatmul.bf16.gmra.mxu0 %v270
      %v303 = vpop.f32.mrf.mxu0
      %v304 = vadd.f32 0.0, %v303
      %v305 = vpop.f32.mrf.mxu0
      %v306 = vadd.f32 0.0, %v305
      %307 = vmatmul.bf16.gmra.mxu0 %v273
      %v308 = vpop.f32.mrf.mxu0
      %v309 = vadd.f32 0.0, %v308
      %v310 = vpop.f32.mrf.mxu0
      %311 = vdwg.mxu0
      %v321 = vunpack.c.l.b16 %v172
      %v322 = vunpack.c.l.b16 %v173
      %v323 = vunpack.c.l.b16 %v174
      %v324 = vunpack.c.l.b16 %v175
      %v325 = vunpack.c.l.b16 %v176
      %v326 = vunpack.c.l.b16 %v177
      %v327 = vunpack.c.l.b16 %v178
      %v328 = vunpack.c.l.b16 %v179
      %v329 = vunpack.c.l.b16 %v180
      %v330 = vpack.c.b16 %v322, %v321
      %v331 = vpack.c.b16 %v324, %v323
      %v332 = vpack.c.b16 %v326, %v325
      %v333 = vpack.c.b16 %v328, %v327
      %v334 = vpack.c.b16 %v329, %v329
      %v336 = vsel %vm259, %v330, 0
      %v339 = vsel %vm259, %v331, 0
      %v342 = vsel %vm259, %v332, 0
      %v345 = vsel %vm259, %v333, 0
      %v348 = vsel %vm259, %v334, 0
      %v351 = vsel %vm275, %v181, 0
      %353 = vmatpush.bf16.msra.mxu0 0
      %354 = vmatpush.bf16.msra.mxu0 0
      %355 = vmatpush.bf16.msra.mxu0 0
      %356 = vmatpush.bf16.msra.mxu0 0
      %357 = vmatpush.bf16.msra.mxu0 0
      %358 = vmatpush.bf16.msra.mxu0 0
      %359 = vmatpush.bf16.msra.mxu0 0
      %360 = vmatpush.bf16.msra.mxu0 %v351
      %361 = vmatmul.bf16.gmra.mxu0 %v336
      %v362 = vpop.f32.mrf.mxu0
      %v363 = vadd.f32 %v289, %v362
      %v364 = vpop.f32.mrf.mxu0
      %v365 = vadd.f32 %v291, %v364
      %366 = vmatmul.bf16.gmra.mxu0 %v339
      %v367 = vpop.f32.mrf.mxu0
      %v368 = vadd.f32 %v294, %v367
      %v369 = vpop.f32.mrf.mxu0
      %v370 = vadd.f32 %v296, %v369
      %371 = vmatmul.bf16.gmra.mxu0 %v342
      %v372 = vpop.f32.mrf.mxu0
      %v373 = vadd.f32 %v299, %v372
      %v374 = vpop.f32.mrf.mxu0
      %v375 = vadd.f32 %v301, %v374
      %376 = vmatmul.bf16.gmra.mxu0 %v345
      %v377 = vpop.f32.mrf.mxu0
      %v378 = vadd.f32 %v304, %v377
      %v379 = vpop.f32.mrf.mxu0
      %v380 = vadd.f32 %v306, %v379
      %381 = vmatmul.bf16.gmra.mxu0 %v348
      %v382 = vpop.f32.mrf.mxu0
      %v383 = vadd.f32 %v309, %v382
      %v384 = vpop.f32.mrf.mxu0
      %385 = vdwg.mxu0
      %v386 = vld [vmem:[%s165] sm:$0xf]
      %v387 = vld [vmem:[%s165 + $0x4] sm:$0xf]
      %v388 = vld [vmem:[%s165 + $0x8] sm:$0xf]
      %v389 = vld [vmem:[%s165 + $0xc] sm:$0xf]
      %v390 = vld [vmem:[%s165 + $0x10] sm:$0xf]
      %v391 = vld [vmem:[%s165 + $0x14] sm:$0xf]
      %v392 = vld [vmem:[%s165 + $0x18] sm:$0xf]
      %v393 = vld [vmem:[%s165 + $0x1c] sm:$0xf]
      %v394 = vld [vmem:[%s165 + $0x20] sm:$0xf]
      %v395 = vld [vmem:[%s165 + $0x24] sm:$0x1]
      %s396 = scalar_lea.vmem %s1, 4
      %v397 = vld [vmem:[%s396] sm:$0x3]
      %v408 = vunpack.c.l.b16 %v386
      %v409 = vunpack.c.l.b16 %v387
      %v410 = vunpack.c.l.b16 %v388
      %v411 = vunpack.c.l.b16 %v389
      %v412 = vunpack.c.l.b16 %v390
      %v413 = vunpack.c.l.b16 %v391
      %v414 = vunpack.c.l.b16 %v392
      %v415 = vunpack.c.l.b16 %v393
      %v416 = vunpack.c.l.b16 %v394
      %v417 = vunpack.c.l.b16 %v395
      %v418 = vpack.c.b16 %v409, %v408
      %v419 = vpack.c.b16 %v411, %v410
      %v420 = vpack.c.b16 %v413, %v412
      %v421 = vpack.c.b16 %v415, %v414
      %v422 = vpack.c.b16 %v417, %v416
      %v424 = vshrl.u32 %v418, 16
      %v426 = vshll.u32 %v418, 16
      %v428 = vrot.slane %v426, 1
      %v429 = vor.u32 %v424, %v428
      %v431 = vshll.u32 %v419, 16
      %v433 = vrot.slane %v431, 1
      %v434 = vsel %vm219, %v429, %v433
      %v435 = vshrl.u32 %v419, 16
      %v437 = vor.u32 %v435, %v433
      %v439 = vshll.u32 %v420, 16
      %v441 = vrot.slane %v439, 1
      %v442 = vsel %vm219, %v437, %v441
      %v443 = vshrl.u32 %v420, 16
      %v445 = vor.u32 %v443, %v441
      %v447 = vshll.u32 %v421, 16
      %v449 = vrot.slane %v447, 1
      %v450 = vsel %vm219, %v445, %v449
      %v451 = vshrl.u32 %v421, 16
      %v453 = vor.u32 %v451, %v449
      %v455 = vshll.u32 %v422, 16
      %v457 = vrot.slane %v455, 1
      %v458 = vsel %vm219, %v453, %v457
      %v459 = vshrl.u32 %v422, 16
      %v461 = vor.u32 %v459, %v457
      %v463 = vsel %vm259, %v434, 0
      %v466 = vsel %vm259, %v442, 0
      %v469 = vsel %vm259, %v450, 0
      %v472 = vsel %vm259, %v458, 0
      %v475 = vsel %vm259, %v461, 0
      %v478 = vsel %vm275, %v397, 0
      %480 = vmatpush.bf16.msra.mxu0 0
      %481 = vmatpush.bf16.msra.mxu0 0
      %482 = vmatpush.bf16.msra.mxu0 0
      %483 = vmatpush.bf16.msra.mxu0 0
      %484 = vmatpush.bf16.msra.mxu0 0
      %485 = vmatpush.bf16.msra.mxu0 0
      %486 = vmatpush.bf16.msra.mxu0 0
      %487 = vmatpush.bf16.msra.mxu0 %v478
      %488 = vmatmul.bf16.gmra.mxu0 %v463
      %v489 = vpop.f32.mrf.mxu0
      %v490 = vadd.f32 0.0, %v489
      %v491 = vpop.f32.mrf.mxu0
      %v492 = vadd.f32 0.0, %v491
      %493 = vmatmul.bf16.gmra.mxu0 %v466
      %v494 = vpop.f32.mrf.mxu0
      %v495 = vadd.f32 0.0, %v494
      %v496 = vpop.f32.mrf.mxu0
      %v497 = vadd.f32 0.0, %v496
      %498 = vmatmul.bf16.gmra.mxu0 %v469
      %v499 = vpop.f32.mrf.mxu0
      %v500 = vadd.f32 0.0, %v499
      %v501 = vpop.f32.mrf.mxu0
      %v502 = vadd.f32 0.0, %v501
      %503 = vmatmul.bf16.gmra.mxu0 %v472
      %v504 = vpop.f32.mrf.mxu0
      %v505 = vadd.f32 0.0, %v504
      %v506 = vpop.f32.mrf.mxu0
      %v507 = vadd.f32 0.0, %v506
      %508 = vmatmul.bf16.gmra.mxu0 %v475
      %v509 = vpop.f32.mrf.mxu0
      %v510 = vadd.f32 0.0, %v509
      %v511 = vpop.f32.mrf.mxu0
      %512 = vdwg.mxu0
      %v513 = vadd.f32 %v363, %v490
      %v514 = vadd.f32 %v365, %v492
      %v515 = vadd.f32 %v368, %v495
      %v516 = vadd.f32 %v370, %v497
      %v517 = vadd.f32 %v373, %v500
      %v518 = vadd.f32 %v375, %v502
      %v519 = vadd.f32 %v378, %v505
      %v520 = vadd.f32 %v380, %v507
      %v521 = vadd.f32 %v383, %v510
      %v522 = vld [vmem:[%s165 + $0x50] sm:$0xe]
      %v523 = vld [vmem:[%s165 + $0x54] sm:$0xf]
      %v524 = vld [vmem:[%s165 + $0x58] sm:$0xf]
      %v525 = vld [vmem:[%s165 + $0x5c] sm:$0xf]
      %v526 = vld [vmem:[%s165 + $0x60] sm:$0xf]
      %v527 = vld [vmem:[%s165 + $0x64] sm:$0xf]
      %v528 = vld [vmem:[%s165 + $0x68] sm:$0xf]
      %v529 = vld [vmem:[%s165 + $0x6c] sm:$0xf]
      %v530 = vld [vmem:[%s165 + $0x70] sm:$0xf]
      %v531 = vld [vmem:[%s165 + $0x74] sm:$0x1]
      %s532 = scalar_lea.vmem %s1, 6
      %v533 = vld [vmem:[%s532] sm:$0x3]
      %v544 = vunpack.c.l.b16 %v522
      %v545 = vunpack.c.l.b16 %v523
      %v546 = vunpack.c.l.b16 %v524
      %v547 = vunpack.c.l.b16 %v525
      %v548 = vunpack.c.l.b16 %v526
      %v549 = vunpack.c.l.b16 %v527
      %v550 = vunpack.c.l.b16 %v528
      %v551 = vunpack.c.l.b16 %v529
      %v552 = vunpack.c.l.b16 %v530
      %v553 = vunpack.c.l.b16 %v531
      %v554 = vpack.c.b16 %v545, %v544
      %v555 = vpack.c.b16 %v547, %v546
      %v556 = vpack.c.b16 %v549, %v548
      %v557 = vpack.c.b16 %v551, %v550
      %v558 = vpack.c.b16 %v553, %v552
      %vm559 = vcmask 1046528
      %v560 = vrot.slane %v554, 1
      %v561 = vrot.slane %v555, 1
      %v562 = vsel %vm559, %v560, %v561
      %v563 = vrot.slane %v556, 1
      %v564 = vsel %vm559, %v561, %v563
      %v565 = vrot.slane %v557, 1
      %v566 = vsel %vm559, %v563, %v565
      %v567 = vrot.slane %v558, 1
      %v568 = vsel %vm559, %v565, %v567
      %v570 = vsel %vm259, %v562, 0
      %v573 = vsel %vm259, %v564, 0
      %v576 = vsel %vm259, %v566, 0
      %v579 = vsel %vm259, %v568, 0
      %v582 = vsel %vm259, %v567, 0
      %v585 = vsel %vm275, %v533, 0
      %587 = vmatpush.bf16.msra.mxu0 0
      %588 = vmatpush.bf16.msra.mxu0 0
      %589 = vmatpush.bf16.msra.mxu0 0
      %590 = vmatpush.bf16.msra.mxu0 0
      %591 = vmatpush.bf16.msra.mxu0 0
      %592 = vmatpush.bf16.msra.mxu0 0
      %593 = vmatpush.bf16.msra.mxu0 0
      %594 = vmatpush.bf16.msra.mxu0 %v585
      %595 = vmatmul.bf16.gmra.mxu0 %v570
      %v596 = vpop.f32.mrf.mxu0
      %v597 = vadd.f32 0.0, %v596
      %v598 = vpop.f32.mrf.mxu0
      %v599 = vadd.f32 0.0, %v598
      %600 = vmatmul.bf16.gmra.mxu0 %v573
      %v601 = vpop.f32.mrf.mxu0
      %v602 = vadd.f32 0.0, %v601
      %v603 = vpop.f32.mrf.mxu0
      %v604 = vadd.f32 0.0, %v603
      %605 = vmatmul.bf16.gmra.mxu0 %v576
      %v606 = vpop.f32.mrf.mxu0
      %v607 = vadd.f32 0.0, %v606
      %v608 = vpop.f32.mrf.mxu0
      %v609 = vadd.f32 0.0, %v608
      %610 = vmatmul.bf16.gmra.mxu0 %v579
      %v611 = vpop.f32.mrf.mxu0
      %v612 = vadd.f32 0.0, %v611
      %v613 = vpop.f32.mrf.mxu0
      %v614 = vadd.f32 0.0, %v613
      %615 = vmatmul.bf16.gmra.mxu0 %v582
      %v616 = vpop.f32.mrf.mxu0
      %v617 = vadd.f32 0.0, %v616
      %v618 = vpop.f32.mrf.mxu0
      %619 = vdwg.mxu0
      %v620 = vadd.f32 %v513, %v597
      %v621 = vadd.f32 %v514, %v599
      %v622 = vadd.f32 %v515, %v602
      %v623 = vadd.f32 %v516, %v604
      %v624 = vadd.f32 %v517, %v607
      %v625 = vadd.f32 %v518, %v609
      %v626 = vadd.f32 %v519, %v612
      %v627 = vadd.f32 %v520, %v614
      %v628 = vadd.f32 %v521, %v617
      %v629 = vld [vmem:[%s165 + $0x78] sm:$0xe]
      %v630 = vld [vmem:[%s165 + $0x7c] sm:$0xf]
      %v631 = vld [vmem:[%s165 + $0x80] sm:$0xf]
      %v632 = vld [vmem:[%s165 + $0x84] sm:$0xf]
      %v633 = vld [vmem:[%s165 + $0x88] sm:$0xf]
      %v634 = vld [vmem:[%s165 + $0x8c] sm:$0xf]
      %v635 = vld [vmem:[%s165 + $0x90] sm:$0xf]
      %v636 = vld [vmem:[%s165 + $0x94] sm:$0xf]
      %v637 = vld [vmem:[%s165 + $0x98] sm:$0xf]
      %v638 = vld [vmem:[%s165 + $0x9c] sm:$0x3]
      %s639 = scalar_lea.vmem %s1, 8
      %v640 = vld [vmem:[%s639] sm:$0x3]
      %v651 = vunpack.c.l.b16 %v629
      %v652 = vunpack.c.l.b16 %v630
      %v653 = vunpack.c.l.b16 %v631
      %v654 = vunpack.c.l.b16 %v632
      %v655 = vunpack.c.l.b16 %v633
      %v656 = vunpack.c.l.b16 %v634
      %v657 = vunpack.c.l.b16 %v635
      %v658 = vunpack.c.l.b16 %v636
      %v659 = vunpack.c.l.b16 %v637
      %v660 = vunpack.c.l.b16 %v638
      %v661 = vpack.c.b16 %v652, %v651
      %v662 = vpack.c.b16 %v654, %v653
      %v663 = vpack.c.b16 %v656, %v655
      %v664 = vpack.c.b16 %v658, %v657
      %v665 = vpack.c.b16 %v660, %v659
      %vm666 = vsmask.f32 6400
      %v668 = vshrl.u32 %v661, 16
      %v670 = vrot.slane %v668, 1
      %v671 = vshll.u32 %v661, 16
      %v673 = vrot.slane %v671, 2
      %v674 = vor.u32 %v670, %v673
      %v676 = vshrl.u32 %v662, 16
      %v678 = vrot.slane %v676, 1
      %v679 = vshll.u32 %v662, 16
      %v681 = vrot.slane %v679, 2
      %v682 = vor.u32 %v678, %v681
      %v683 = vsel %vm666, %v674, %v682
      %v685 = vshrl.u32 %v663, 16
      %v687 = vrot.slane %v685, 1
      %v688 = vshll.u32 %v663, 16
      %v690 = vrot.slane %v688, 2
      %v691 = vor.u32 %v687, %v690
      %v692 = vsel %vm666, %v682, %v691
      %v694 = vshrl.u32 %v664, 16
      %v696 = vrot.slane %v694, 1
      %v697 = vshll.u32 %v664, 16
      %v699 = vrot.slane %v697, 2
      %v700 = vor.u32 %v696, %v699
      %v701 = vsel %vm666, %v691, %v700
      %v703 = vshrl.u32 %v665, 16
      %v705 = vrot.slane %v703, 1
      %v706 = vshll.u32 %v665, 16
      %v708 = vrot.slane %v706, 2
      %v709 = vor.u32 %v705, %v708
      %v710 = vsel %vm666, %v700, %v709
      %v712 = vsel %vm259, %v683, 0
      %v715 = vsel %vm259, %v692, 0
      %v718 = vsel %vm259, %v701, 0
      %v721 = vsel %vm259, %v710, 0
      %v724 = vsel %vm259, %v709, 0
      %v727 = vsel %vm275, %v640, 0
      %729 = vmatpush.bf16.msra.mxu0 0
      %730 = vmatpush.bf16.msra.mxu0 0
      %731 = vmatpush.bf16.msra.mxu0 0
      %732 = vmatpush.bf16.msra.mxu0 0
      %733 = vmatpush.bf16.msra.mxu0 0
      %734 = vmatpush.bf16.msra.mxu0 0
      %735 = vmatpush.bf16.msra.mxu0 0
      %736 = vmatpush.bf16.msra.mxu0 %v727
      %737 = vmatmul.bf16.gmra.mxu0 %v712
      %v738 = vpop.f32.mrf.mxu0
      %v739 = vadd.f32 0.0, %v738
      %v740 = vpop.f32.mrf.mxu0
      %v741 = vadd.f32 0.0, %v740
      %742 = vmatmul.bf16.gmra.mxu0 %v715
      %v743 = vpop.f32.mrf.mxu0
      %v744 = vadd.f32 0.0, %v743
      %v745 = vpop.f32.mrf.mxu0
      %v746 = vadd.f32 0.0, %v745
      %747 = vmatmul.bf16.gmra.mxu0 %v718
      %v748 = vpop.f32.mrf.mxu0
      %v749 = vadd.f32 0.0, %v748
      %v750 = vpop.f32.mrf.mxu0
      %v751 = vadd.f32 0.0, %v750
      %752 = vmatmul.bf16.gmra.mxu0 %v721
      %v753 = vpop.f32.mrf.mxu0
      %v754 = vadd.f32 0.0, %v753
      %v755 = vpop.f32.mrf.mxu0
      %v756 = vadd.f32 0.0, %v755
      %757 = vmatmul.bf16.gmra.mxu0 %v724
      %v758 = vpop.f32.mrf.mxu0
      %v759 = vadd.f32 0.0, %v758
      %v760 = vpop.f32.mrf.mxu0
      %761 = vdwg.mxu0
      %v762 = vadd.f32 %v620, %v739
      %v763 = vadd.f32 %v621, %v741
      %v764 = vadd.f32 %v622, %v744
      %v765 = vadd.f32 %v623, %v746
      %v766 = vadd.f32 %v624, %v749
      %v767 = vadd.f32 %v625, %v751
      %v768 = vadd.f32 %v626, %v754
      %v769 = vadd.f32 %v627, %v756
      %v770 = vadd.f32 %v628, %v759
      %v771 = vld [vmem:[%s165 + $0x74] sm:$0x3]
      %s772 = scalar_lea.vmem %s1, 10
      %v773 = vld [vmem:[%s772] sm:$0x3]
      %v775 = vunpack.c.l.b16 %v771
      %v776 = vpack.c.b16 %v775, %v552
      %v778 = vshrl.u32 %v554, 16
      %v780 = vrot.slane %v778, 1
      %v781 = vshll.u32 %v554, 16
      %v783 = vrot.slane %v781, 2
      %v784 = vor.u32 %v780, %v783
      %v786 = vshrl.u32 %v555, 16
      %v788 = vrot.slane %v786, 1
      %v789 = vshll.u32 %v555, 16
      %v791 = vrot.slane %v789, 2
      %v792 = vor.u32 %v788, %v791
      %v793 = vsel %vm666, %v784, %v792
      %v795 = vshrl.u32 %v556, 16
      %v797 = vrot.slane %v795, 1
      %v798 = vshll.u32 %v556, 16
      %v800 = vrot.slane %v798, 2
      %v801 = vor.u32 %v797, %v800
      %v802 = vsel %vm666, %v792, %v801
      %v804 = vshrl.u32 %v557, 16
      %v806 = vrot.slane %v804, 1
      %v807 = vshll.u32 %v557, 16
      %v809 = vrot.slane %v807, 2
      %v810 = vor.u32 %v806, %v809
      %v811 = vsel %vm666, %v801, %v810
      %v813 = vshrl.u32 %v776, 16
      %v815 = vrot.slane %v813, 1
      %v816 = vshll.u32 %v776, 16
      %v818 = vrot.slane %v816, 2
      %v819 = vor.u32 %v815, %v818
      %v820 = vsel %vm666, %v810, %v819
      %v822 = vsel %vm259, %v793, 0
      %v825 = vsel %vm259, %v802, 0
      %v828 = vsel %vm259, %v811, 0
      %v831 = vsel %vm259, %v820, 0
      %v834 = vsel %vm259, %v819, 0
      %v837 = vsel %vm275, %v773, 0
      %839 = vmatpush.bf16.msra.mxu0 0
      %840 = vmatpush.bf16.msra.mxu0 0
      %841 = vmatpush.bf16.msra.mxu0 0
      %842 = vmatpush.bf16.msra.mxu0 0
      %843 = vmatpush.bf16.msra.mxu0 0
      %844 = vmatpush.bf16.msra.mxu0 0
      %845 = vmatpush.bf16.msra.mxu0 0
      %846 = vmatpush.bf16.msra.mxu0 %v837
      %847 = vmatmul.bf16.gmra.mxu0 %v822
      %v848 = vpop.f32.mrf.mxu0
      %v849 = vadd.f32 0.0, %v848
      %v850 = vpop.f32.mrf.mxu0
      %v851 = vadd.f32 0.0, %v850
      %852 = vmatmul.bf16.gmra.mxu0 %v825
      %v853 = vpop.f32.mrf.mxu0
      %v854 = vadd.f32 0.0, %v853
      %v855 = vpop.f32.mrf.mxu0
      %v856 = vadd.f32 0.0, %v855
      %857 = vmatmul.bf16.gmra.mxu0 %v828
      %v858 = vpop.f32.mrf.mxu0
      %v859 = vadd.f32 0.0, %v858
      %v860 = vpop.f32.mrf.mxu0
      %v861 = vadd.f32 0.0, %v860
      %862 = vmatmul.bf16.gmra.mxu0 %v831
      %v863 = vpop.f32.mrf.mxu0
      %v864 = vadd.f32 0.0, %v863
      %v865 = vpop.f32.mrf.mxu0
      %v866 = vadd.f32 0.0, %v865
      %867 = vmatmul.bf16.gmra.mxu0 %v834
      %v868 = vpop.f32.mrf.mxu0
      %v869 = vadd.f32 0.0, %v868
      %v870 = vpop.f32.mrf.mxu0
      %871 = vdwg.mxu0
      %v872 = vadd.f32 %v762, %v849
      %v873 = vadd.f32 %v763, %v851
      %v874 = vadd.f32 %v764, %v854
      %v875 = vadd.f32 %v765, %v856
      %v876 = vadd.f32 %v766, %v859
      %v877 = vadd.f32 %v767, %v861
      %v878 = vadd.f32 %v768, %v864
      %v879 = vadd.f32 %v769, %v866
      %v880 = vadd.f32 %v770, %v869
      %v881 = vld [vmem:[%s165 + $0x4] sm:$0xf]
      %v882 = vld [vmem:[%s165 + $0x8] sm:$0xf]
      %v883 = vld [vmem:[%s165 + $0xc] sm:$0xf]
      %v884 = vld [vmem:[%s165 + $0x10] sm:$0xf]
      %v885 = vld [vmem:[%s165 + $0x14] sm:$0xf]
      %v886 = vld [vmem:[%s165 + $0x18] sm:$0xf]
      %v887 = vld [vmem:[%s165 + $0x1c] sm:$0xf]
      %v888 = vld [vmem:[%s165 + $0x20] sm:$0xf]
      %v889 = vld [vmem:[%s165 + $0x24] sm:$0xf]
      %v890 = vld [vmem:[%s165 + $0x28] sm:$0x1]
      %s891 = scalar_lea.vmem %s1, 12
      %v892 = vld [vmem:[%s891] sm:$0x3]
      %v903 = vunpack.c.l.b16 %v881
      %v904 = vunpack.c.l.b16 %v882
      %v905 = vunpack.c.l.b16 %v883
      %v906 = vunpack.c.l.b16 %v884
      %v907 = vunpack.c.l.b16 %v885
      %v908 = vunpack.c.l.b16 %v886
      %v909 = vunpack.c.l.b16 %v887
      %v910 = vunpack.c.l.b16 %v888
      %v911 = vunpack.c.l.b16 %v889
      %v912 = vunpack.c.l.b16 %v890
      %v913 = vpack.c.b16 %v904, %v903
      %v914 = vpack.c.b16 %v906, %v905
      %v915 = vpack.c.b16 %v908, %v907
      %v916 = vpack.c.b16 %v910, %v909
      %v917 = vpack.c.b16 %v912, %v911
      %v919 = vshrl.u32 %v913, 16
      %v921 = vshll.u32 %v913, 16
      %v923 = vrot.slane %v921, 1
      %v924 = vor.u32 %v919, %v923
      %v926 = vshll.u32 %v914, 16
      %v928 = vrot.slane %v926, 1
      %v929 = vsel %vm219, %v924, %v928
      %v930 = vshrl.u32 %v914, 16
      %v932 = vor.u32 %v930, %v928
      %v934 = vshll.u32 %v915, 16
      %v936 = vrot.slane %v934, 1
      %v937 = vsel %vm219, %v932, %v936
      %v938 = vshrl.u32 %v915, 16
      %v940 = vor.u32 %v938, %v936
      %v942 = vshll.u32 %v916, 16
      %v944 = vrot.slane %v942, 1
      %v945 = vsel %vm219, %v940, %v944
      %v946 = vshrl.u32 %v916, 16
      %v948 = vor.u32 %v946, %v944
      %v950 = vshll.u32 %v917, 16
      %v952 = vrot.slane %v950, 1
      %v953 = vsel %vm219, %v948, %v952
      %v954 = vshrl.u32 %v917, 16
      %v956 = vor.u32 %v954, %v952
      %v958 = vsel %vm259, %v929, 0
      %v961 = vsel %vm259, %v937, 0
      %v964 = vsel %vm259, %v945, 0
      %v967 = vsel %vm259, %v953, 0
      %v970 = vsel %vm259, %v956, 0
      %v973 = vsel %vm275, %v892, 0
      %975 = vmatpush.bf16.msra.mxu0 0
      %976 = vmatpush.bf16.msra.mxu0 0
      %977 = vmatpush.bf16.msra.mxu0 0
      %978 = vmatpush.bf16.msra.mxu0 0
      %979 = vmatpush.bf16.msra.mxu0 0
      %980 = vmatpush.bf16.msra.mxu0 0
      %981 = vmatpush.bf16.msra.mxu0 0
      %982 = vmatpush.bf16.msra.mxu0 %v973
      %983 = vmatmul.bf16.gmra.mxu0 %v958
      %v984 = vpop.f32.mrf.mxu0
      %v985 = vadd.f32 0.0, %v984
      %v986 = vpop.f32.mrf.mxu0
      %v987 = vadd.f32 0.0, %v986
      %988 = vmatmul.bf16.gmra.mxu0 %v961
      %v989 = vpop.f32.mrf.mxu0
      %v990 = vadd.f32 0.0, %v989
      %v991 = vpop.f32.mrf.mxu0
      %v992 = vadd.f32 0.0, %v991
      %993 = vmatmul.bf16.gmra.mxu0 %v964
      %v994 = vpop.f32.mrf.mxu0
      %v995 = vadd.f32 0.0, %v994
      %v996 = vpop.f32.mrf.mxu0
      %v997 = vadd.f32 0.0, %v996
      %998 = vmatmul.bf16.gmra.mxu0 %v967
      %v999 = vpop.f32.mrf.mxu0
      %v1000 = vadd.f32 0.0, %v999
      %v1001 = vpop.f32.mrf.mxu0
      %v1002 = vadd.f32 0.0, %v1001
      %1003 = vmatmul.bf16.gmra.mxu0 %v970
      %v1004 = vpop.f32.mrf.mxu0
      %v1005 = vadd.f32 0.0, %v1004
      %v1006 = vpop.f32.mrf.mxu0
      %1007 = vdwg.mxu0
      %v1008 = vadd.f32 %v872, %v985
      %v1009 = vadd.f32 %v873, %v987
      %v1010 = vadd.f32 %v874, %v990
      %v1011 = vadd.f32 %v875, %v992
      %v1012 = vadd.f32 %v876, %v995
      %v1013 = vadd.f32 %v877, %v997
      %v1014 = vadd.f32 %v878, %v1000
      %v1015 = vadd.f32 %v879, %v1002
      %v1016 = vadd.f32 %v880, %v1005
      %v1017 = vld [vmem:[%s165 + $0x2c] sm:$0xe]
      %v1018 = vld [vmem:[%s165 + $0x30] sm:$0xf]
      %v1019 = vld [vmem:[%s165 + $0x34] sm:$0xf]
      %v1020 = vld [vmem:[%s165 + $0x38] sm:$0xf]
      %v1021 = vld [vmem:[%s165 + $0x3c] sm:$0xf]
      %v1022 = vld [vmem:[%s165 + $0x40] sm:$0xf]
      %v1023 = vld [vmem:[%s165 + $0x44] sm:$0xf]
      %v1024 = vld [vmem:[%s165 + $0x48] sm:$0xf]
      %v1025 = vld [vmem:[%s165 + $0x4c] sm:$0xf]
      %v1026 = vld [vmem:[%s165 + $0x50] sm:$0x1]
      %s1027 = scalar_lea.vmem %s1, 14
      %v1028 = vld [vmem:[%s1027] sm:$0x3]
      %v1039 = vunpack.c.l.b16 %v1017
      %v1040 = vunpack.c.l.b16 %v1018
      %v1041 = vunpack.c.l.b16 %v1019
      %v1042 = vunpack.c.l.b16 %v1020
      %v1043 = vunpack.c.l.b16 %v1021
      %v1044 = vunpack.c.l.b16 %v1022
      %v1045 = vunpack.c.l.b16 %v1023
      %v1046 = vunpack.c.l.b16 %v1024
      %v1047 = vunpack.c.l.b16 %v1025
      %v1048 = vunpack.c.l.b16 %v1026
      %v1049 = vpack.c.b16 %v1040, %v1039
      %v1050 = vpack.c.b16 %v1042, %v1041
      %v1051 = vpack.c.b16 %v1044, %v1043
      %v1052 = vpack.c.b16 %v1046, %v1045
      %v1053 = vpack.c.b16 %v1048, %v1047
      %v1054 = vrot.slane %v1049, 1
      %v1055 = vrot.slane %v1050, 1
      %v1056 = vsel %vm559, %v1054, %v1055
      %v1057 = vrot.slane %v1051, 1
      %v1058 = vsel %vm559, %v1055, %v1057
      %v1059 = vrot.slane %v1052, 1
      %v1060 = vsel %vm559, %v1057, %v1059
      %v1061 = vrot.slane %v1053, 1
      %v1062 = vsel %vm559, %v1059, %v1061
      %v1064 = vsel %vm259, %v1056, 0
      %v1067 = vsel %vm259, %v1058, 0
      %v1070 = vsel %vm259, %v1060, 0
      %v1073 = vsel %vm259, %v1062, 0
      %v1076 = vsel %vm259, %v1061, 0
      %v1079 = vsel %vm275, %v1028, 0
      %1081 = vmatpush.bf16.msra.mxu0 0
      %1082 = vmatpush.bf16.msra.mxu0 0
      %1083 = vmatpush.bf16.msra.mxu0 0
      %1084 = vmatpush.bf16.msra.mxu0 0
      %1085 = vmatpush.bf16.msra.mxu0 0
      %1086 = vmatpush.bf16.msra.mxu0 0
      %1087 = vmatpush.bf16.msra.mxu0 0
      %1088 = vmatpush.bf16.msra.mxu0 %v1079
      %1089 = vmatmul.bf16.gmra.mxu0 %v1064
      %v1090 = vpop.f32.mrf.mxu0
      %v1091 = vadd.f32 0.0, %v1090
      %v1092 = vpop.f32.mrf.mxu0
      %v1093 = vadd.f32 0.0, %v1092
      %1094 = vmatmul.bf16.gmra.mxu0 %v1067
      %v1095 = vpop.f32.mrf.mxu0
      %v1096 = vadd.f32 0.0, %v1095
      %v1097 = vpop.f32.mrf.mxu0
      %v1098 = vadd.f32 0.0, %v1097
      %1099 = vmatmul.bf16.gmra.mxu0 %v1070
      %v1100 = vpop.f32.mrf.mxu0
      %v1101 = vadd.f32 0.0, %v1100
      %v1102 = vpop.f32.mrf.mxu0
      %v1103 = vadd.f32 0.0, %v1102
      %1104 = vmatmul.bf16.gmra.mxu0 %v1073
      %v1105 = vpop.f32.mrf.mxu0
      %v1106 = vadd.f32 0.0, %v1105
      %v1107 = vpop.f32.mrf.mxu0
      %v1108 = vadd.f32 0.0, %v1107
      %1109 = vmatmul.bf16.gmra.mxu0 %v1076
      %v1110 = vpop.f32.mrf.mxu0
      %v1111 = vadd.f32 0.0, %v1110
      %v1112 = vpop.f32.mrf.mxu0
      %1113 = vdwg.mxu0
      %v1114 = vadd.f32 %v1008, %v1091
      %v1115 = vadd.f32 %v1009, %v1093
      %v1116 = vadd.f32 %v1010, %v1096
      %v1117 = vadd.f32 %v1011, %v1098
      %v1118 = vadd.f32 %v1012, %v1101
      %v1119 = vadd.f32 %v1013, %v1103
      %v1120 = vadd.f32 %v1014, %v1106
      %v1121 = vadd.f32 %v1015, %v1108
      %v1122 = vadd.f32 %v1016, %v1111
      %v1123 = vld [vmem:[%s165 + $0x4] sm:$0xe]
      %s1124 = scalar_lea.vmem %s1, 16
      %v1125 = vld [vmem:[%s1124] sm:$0x3]
      %v1127 = vunpack.c.l.b16 %v1123
      %v1128 = vpack.c.b16 %v904, %v1127
      %v1129 = vrot.slane %v1128, 1
      %v1130 = vrot.slane %v914, 1
      %v1131 = vsel %vm559, %v1129, %v1130
      %v1132 = vrot.slane %v915, 1
      %v1133 = vsel %vm559, %v1130, %v1132
      %v1134 = vrot.slane %v916, 1
      %v1135 = vsel %vm559, %v1132, %v1134
      %v1136 = vrot.slane %v917, 1
      %v1137 = vsel %vm559, %v1134, %v1136
      %v1139 = vsel %vm259, %v1131, 0
      %v1142 = vsel %vm259, %v1133, 0
      %v1145 = vsel %vm259, %v1135, 0
      %v1148 = vsel %vm259, %v1137, 0
      %v1151 = vsel %vm259, %v1136, 0
      %v1154 = vsel %vm275, %v1125, 0
      %1156 = vmatpush.bf16.msra.mxu0 0
      %1157 = vmatpush.bf16.msra.mxu0 0
      %1158 = vmatpush.bf16.msra.mxu0 0
      %1159 = vmatpush.bf16.msra.mxu0 0
      %1160 = vmatpush.bf16.msra.mxu0 0
      %1161 = vmatpush.bf16.msra.mxu0 0
      %1162 = vmatpush.bf16.msra.mxu0 0
      %1163 = vmatpush.bf16.msra.mxu0 %v1154
      %1164 = vmatmul.bf16.gmra.mxu0 %v1139
      %v1165 = vpop.f32.mrf.mxu0
      %v1166 = vadd.f32 0.0, %v1165
      %v1167 = vpop.f32.mrf.mxu0
      %v1168 = vadd.f32 0.0, %v1167
      %1169 = vmatmul.bf16.gmra.mxu0 %v1142
      %v1170 = vpop.f32.mrf.mxu0
      %v1171 = vadd.f32 0.0, %v1170
      %v1172 = vpop.f32.mrf.mxu0
      %v1173 = vadd.f32 0.0, %v1172
      %1174 = vmatmul.bf16.gmra.mxu0 %v1145
      %v1175 = vpop.f32.mrf.mxu0
      %v1176 = vadd.f32 0.0, %v1175
      %v1177 = vpop.f32.mrf.mxu0
      %v1178 = vadd.f32 0.0, %v1177
      %1179 = vmatmul.bf16.gmra.mxu0 %v1148
      %v1180 = vpop.f32.mrf.mxu0
      %v1181 = vadd.f32 0.0, %v1180
      %v1182 = vpop.f32.mrf.mxu0
      %v1183 = vadd.f32 0.0, %v1182
      %1184 = vmatmul.bf16.gmra.mxu0 %v1151
      %v1185 = vpop.f32.mrf.mxu0
      %v1186 = vadd.f32 0.0, %v1185
      %v1187 = vpop.f32.mrf.mxu0
      %1188 = vdwg.mxu0
      %v1189 = vadd.f32 %v1114, %v1166
      %v1190 = vadd.f32 %v1115, %v1168
      %v1191 = vadd.f32 %v1116, %v1171
      %v1192 = vadd.f32 %v1117, %v1173
      %v1193 = vadd.f32 %v1118, %v1176
      %v1194 = vadd.f32 %v1119, %v1178
      %v1195 = vadd.f32 %v1120, %v1181
      %v1196 = vadd.f32 %v1121, %v1183
      %v1197 = vadd.f32 %v1122, %v1186
      %v1198 = vld [vmem:[%s2] sm:$0x1]
      %v1200 = vperm.slane %v1198, 0
      %v1202 = vadd.f32 %v1189, %v1200
      %v1203 = vadd.f32 %v1190, %v1200
      %v1204 = vadd.f32 %v1191, %v1200
      %v1205 = vadd.f32 %v1192, %v1200
      %v1206 = vadd.f32 %v1193, %v1200
      %v1207 = vadd.f32 %v1194, %v1200
      %v1208 = vadd.f32 %v1195, %v1200
      %v1209 = vadd.f32 %v1196, %v1200
      %v1210 = vadd.f32 %v1197, %v1200
      %v1211 = vmax.f32 %v1202, 0.0
      %v1212 = vmax.f32 %v1203, 0.0
      %v1213 = vmax.f32 %v1204, 0.0
      %v1214 = vmax.f32 %v1205, 0.0
      %v1215 = vmax.f32 %v1206, 0.0
      %v1216 = vmax.f32 %v1207, 0.0
      %v1217 = vmax.f32 %v1208, 0.0
      %v1218 = vmax.f32 %v1209, 0.0
      %v1219 = vmax.f32 %v1210, 0.0
      %v1220 = vpack.c.bf16 %v1211, %v1211
      %v1221 = vpack.c.bf16 %v1212, %v1212
      %v1222 = vpack.c.bf16 %v1213, %v1213
      %v1223 = vpack.c.bf16 %v1214, %v1214
      %v1224 = vpack.c.bf16 %v1215, %v1215
      %v1225 = vpack.c.bf16 %v1216, %v1216
      %v1226 = vpack.c.bf16 %v1217, %v1217
      %v1227 = vpack.c.bf16 %v1218, %v1218
      %v1228 = vpack.c.bf16 %v1219, %v1219
      %1229 = vst [vmem:[%s170] sm:$0xf] %v1220
      %1230 = vst [vmem:[%s170 + $0x4] sm:$0xf] %v1221
      %1231 = vst [vmem:[%s170 + $0x8] sm:$0xf] %v1222
      %1232 = vst [vmem:[%s170 + $0xc] sm:$0xf] %v1223
      %1233 = vst [vmem:[%s170 + $0x10] sm:$0xf] %v1224
      %1234 = vst [vmem:[%s170 + $0x14] sm:$0xf] %v1225
      %1235 = vst [vmem:[%s170 + $0x18] sm:$0xf] %v1226
      %1236 = vst [vmem:[%s170 + $0x1c] sm:$0xf] %v1227
      %1237 = vst [vmem:[%s170 + $0x20] sm:$0xf] %v1228
      %p1238 = scmp.lt.s32.totalorder %s14, 1
      %s1239 = scalar_select %p1238, %s14, 1
      %s1240 = smul.addr %s1239, 9
      %s1241 = smul.addr %s1240, 4
      %s1242 = scalar_lea.vmem %s3, %s1241
      // Predicated region
      $region33: #{basic_block_forward.2} parent=31 // pred_check
        %p1243 = pneg %p100
      $region34: #{basic_block_forward.2} parent=31 // pred_check_branch
        %1245 = sbr.rel (%p1243) target = $region36
      $region35: #{basic_block_forward.2} parent=31 // pred_region
        _
      $region36: #{basic_block_forward.2} parent=31 // pred_fallthru
        _
    $region32: #{basic_block_forward.2} parent=5 // pred_fallthru
      _
    %p1246 = scmp.le.s32.totalorder 2, %s9
    // Predicated region
    $region37: #{basic_block_forward.2} parent=5 // pred_check
      %p1247 = pneg %p1246
    $region38: #{basic_block_forward.2} parent=5 // pred_check_branch
      %1249 = sbr.rel (%p1247) target = $region40
    $region39: #{basic_block_forward.2} parent=5 // pred_region
      %s1250 = ssub.s32 %s9, 2
      // Predicated region
      $region41: #{basic_block_forward.2} parent=39 // pred_check
        %p1251 = pneg %p106
      $region42: #{basic_block_forward.2} parent=39 // pred_check_branch
        %1253 = sbr.rel (%p1251) target = $region44
      $region43: #{basic_block_forward.2} parent=39 // pred_region
        %p1254 = scmp.lt.s32.totalorder %s15, 1
        %s1255 = scalar_select %p1254, %s15, 1
        %s1256 = smul.addr %s1255, 9
        %s1257 = smul.addr %s1256, 4
        %s1258 = scalar_lea.vmem %s3, %s1257
      $region44: #{basic_block_forward.2} parent=39 // pred_fallthru
        _
    $region40: #{basic_block_forward.2} parent=5 // pred_fallthru
      _
  $region6: #{basic_block_forward.2} parent=0 // loop_footer
    %s13 = sadd.s32 1, %s9
  $region7: #{basic_block_forward.2} parent=0 // loop_footer_branch
    %8 = sbr.rel target = $region3
  $region8: #{basic_block_forward.2} parent=0 // loop_exit
    _

// kernel: basic_block_forward.3
$region0: #{basic_block_forward.3}
  #allocation0 [shape = 'u32[]', space=smem, size = 0x4, offset = 0x4, fixed_abs, tag = 'smem constant byte address 0x4 - core index']
  #allocation1 [shape = 'u32[72,128]{1,0:T(1,128)}', space=vmem, size = 0x9000, scoped, tag = 'internal scratch']
  %s0 = inlined_call_operand.vmem [shape: bf16[2,102,8], index: 0, kind: input, shape index: {}]
  %s1 = inlined_call_operand.vmem [shape: bf16[2,80,4], index: 1, kind: input, shape index: {}]
  %s2 = inlined_call_operand.vmem [shape: bf16[9,8,128], index: 2, kind: input, shape index: {}]
  %s3 = inlined_call_operand.vmem [shape: bf16[1,4,128], index: 3, kind: input, shape index: {}]
  %s4 = inlined_call_operand.vmem [shape: f32[1,128], index: 4, kind: input, shape index: {}]
  %s5 = inlined_call_operand.vmem [shape: f32[2,80,128], index: 5, kind: output, shape index: {}]
  %s6 = sld [smem:[#allocation0]]
  $region53: #{basic_block_forward.3} parent=0
    _
  %s8 = ssub.s32 1, %s6
  %s9 = scalar_select 0, %s8, %s6
  loop: start=0, step=1, limit=4
  $region2: #{basic_block_forward.3} parent=0 // loop_pre_header
    _
  $region3: #{basic_block_forward.3} parent=0 // loop_header
    %s11 = sphi 0, %s15
    %p12 = scmp.ge.s32.totalorder %s11, 4
    %s21 = sphi 0, %s23
    %s24 = sphi 0, %s21
    %s25 = sphi 0, %s24
    %s41 = sphi 0, %s25
    %s47 = sphi 0, %s49
    %s50 = sphi 0, %s47
    %s51 = sphi 0, %s50
    %s67 = sphi 0, %s51
    %s71 = sphi 0, %s71
    %s73 = sphi 0, %s71
    %s74 = sphi 0, %s73
    %s88 = sphi 0, %s74
    %s92 = sphi 0, %s92
    %s94 = sphi 0, %s92
    %s95 = sphi 0, %s94
    %s109 = sphi 0, %s95
    %s113 = sphi 0, %s113
    %s115 = sphi 0, %s113
    %s116 = sphi 0, %s115
    %s130 = sphi 0, %s116
    %s136 = sphi 0, %s138
    %s139 = sphi 0, %s136
    %s140 = sphi 0, %s139
    %s156 = sphi 0, %s140
  $region4: #{basic_block_forward.3} parent=0 // loop_header_branch
    %14 = sbr.rel (%p12) target = $region8
  $region5: #{basic_block_forward.3} parent=0 // loop_body
    %s16 = ssub.s32 %s11, 1
    %s17 = ssub.s32 %s11, 2
    %s18 = sadd.s32 %s11, 1
    %s19 = ssub.s32 %s11, %s18
    %p20 = scmp.eq.s32.totalorder %s19, 0
    %s22 = sadd.s32 %s21, 1
    %s23 = scalar_select %p20, %s21, %s22
    %p26 = pneg %p20
    %p27 = scmp.eq.s32.totalorder %s11, 1
    %p28 = por %p26, %p27
    %p29 = scmp.ne.s32.totalorder %s21, %s24
    %p30 = scmp.eq.s32.totalorder %s11, 0
    %p31 = por %p29, %p30
    %p32 = scmp.ne.s32.totalorder %s21, %s24
    %p33 = scmp.eq.s32.totalorder %s16, 1
    %p34 = por %p32, %p33
    %p35 = scmp.ne.s32.totalorder %s24, %s25
    %p36 = scmp.eq.s32.totalorder %s16, 0
    %p37 = por %p35, %p36
    %p38 = scmp.ne.s32.totalorder %s24, %s25
    %p39 = scmp.eq.s32.totalorder %s17, 1
    %p40 = por %p38, %p39
    %p42 = scmp.ne.s32.totalorder %s25, %s41
    %p43 = scmp.eq.s32.totalorder %s17, 0
    %p44 = por %p42, %p43
    %s45 = ssub.s32 %s11, %s18
    %p46 = scmp.eq.s32.totalorder %s45, 0
    %s48 = sadd.s32 %s47, 1
    %s49 = scalar_select %p46, %s47, %s48
    %p52 = pneg %p46
    %p53 = scmp.eq.s32.totalorder %s11, 1
    %p54 = por %p52, %p53
    %p55 = scmp.ne.s32.totalorder %s47, %s50
    %p56 = scmp.eq.s32.totalorder %s11, 0
    %p57 = por %p55, %p56
    %p58 = scmp.ne.s32.totalorder %s47, %s50
    %p59 = scmp.eq.s32.totalorder %s16, 1
    %p60 = por %p58, %p59
    %p61 = scmp.ne.s32.totalorder %s50, %s51
    %p62 = scmp.eq.s32.totalorder %s16, 0
    %p63 = por %p61, %p62
    %p64 = scmp.ne.s32.totalorder %s50, %s51
    %p65 = scmp.eq.s32.totalorder %s17, 1
    %p66 = por %p64, %p65
    %p68 = scmp.ne.s32.totalorder %s51, %s67
    %p69 = scmp.eq.s32.totalorder %s17, 0
    %p70 = por %p68, %p69
    %s72 = sadd.s32 %s71, 1
    %p75 = scmp.eq.s32.totalorder %s11, 1
    %p76 = scmp.ne.s32.totalorder %s71, %s73
    %p77 = scmp.eq.s32.totalorder %s11, 0
    %p78 = por %p76, %p77
    %p79 = scmp.ne.s32.totalorder %s71, %s73
    %p80 = scmp.eq.s32.totalorder %s16, 1
    %p81 = por %p79, %p80
    %p82 = scmp.ne.s32.totalorder %s73, %s74
    %p83 = scmp.eq.s32.totalorder %s16, 0
    %p84 = por %p82, %p83
    %p85 = scmp.ne.s32.totalorder %s73, %s74
    %p86 = scmp.eq.s32.totalorder %s17, 1
    %p87 = por %p85, %p86
    %p89 = scmp.ne.s32.totalorder %s74, %s88
    %p90 = scmp.eq.s32.totalorder %s17, 0
    %p91 = por %p89, %p90
    %s93 = sadd.s32 %s92, 1
    %p96 = scmp.eq.s32.totalorder %s11, 1
    %p97 = scmp.ne.s32.totalorder %s92, %s94
    %p98 = scmp.eq.s32.totalorder %s11, 0
    %p99 = por %p97, %p98
    %p100 = scmp.ne.s32.totalorder %s92, %s94
    %p101 = scmp.eq.s32.totalorder %s16, 1
    %p102 = por %p100, %p101
    %p103 = scmp.ne.s32.totalorder %s94, %s95
    %p104 = scmp.eq.s32.totalorder %s16, 0
    %p105 = por %p103, %p104
    %p106 = scmp.ne.s32.totalorder %s94, %s95
    %p107 = scmp.eq.s32.totalorder %s17, 1
    %p108 = por %p106, %p107
    %p110 = scmp.ne.s32.totalorder %s95, %s109
    %p111 = scmp.eq.s32.totalorder %s17, 0
    %p112 = por %p110, %p111
    %s114 = sadd.s32 %s113, 1
    %p117 = scmp.eq.s32.totalorder %s11, 1
    %p118 = scmp.ne.s32.totalorder %s113, %s115
    %p119 = scmp.eq.s32.totalorder %s11, 0
    %p120 = por %p118, %p119
    %p121 = scmp.ne.s32.totalorder %s113, %s115
    %p122 = scmp.eq.s32.totalorder %s16, 1
    %p123 = por %p121, %p122
    %p124 = scmp.ne.s32.totalorder %s115, %s116
    %p125 = scmp.eq.s32.totalorder %s16, 0
    %p126 = por %p124, %p125
    %p127 = scmp.ne.s32.totalorder %s115, %s116
    %p128 = scmp.eq.s32.totalorder %s17, 1
    %p129 = por %p127, %p128
    %p131 = scmp.ne.s32.totalorder %s116, %s130
    %p132 = scmp.eq.s32.totalorder %s17, 0
    %p133 = por %p131, %p132
    %s134 = ssub.s32 %s11, %s18
    %p135 = scmp.eq.s32.totalorder %s134, 0
    %s137 = sadd.s32 %s136, 1
    %s138 = scalar_select %p135, %s136, %s137
    %p141 = pneg %p135
    %p142 = scmp.eq.s32.totalorder %s11, 1
    %p143 = por %p141, %p142
    %p144 = scmp.ne.s32.totalorder %s136, %s139
    %p145 = scmp.eq.s32.totalorder %s11, 0
    %p146 = por %p144, %p145
    %p147 = scmp.ne.s32.totalorder %s136, %s139
    %p148 = scmp.eq.s32.totalorder %s16, 1
    %p149 = por %p147, %p148
    %p150 = scmp.ne.s32.totalorder %s139, %s140
    %p151 = scmp.eq.s32.totalorder %s16, 0
    %p152 = por %p150, %p151
    %p153 = scmp.ne.s32.totalorder %s139, %s140
    %p154 = scmp.eq.s32.totalorder %s17, 1
    %p155 = por %p153, %p154
    %p157 = scmp.ne.s32.totalorder %s140, %s156
    %p158 = scmp.eq.s32.totalorder %s17, 0
    %p159 = por %p157, %p158
    %p160 = scmp.le.s32.totalorder 1, %s11
    %p161 = scmp.lt.s32.totalorder %s11, 3
    %p162 = pnand %p160, %p161
    %p163 = pneg %p162
    // Predicated region
    $region9: #{basic_block_forward.3} parent=5 // pred_check
      _
    $region10: #{basic_block_forward.3} parent=5 // pred_check_branch
      %165 = sbr.rel (%p162) target = $region12
    $region11: #{basic_block_forward.3} parent=5 // pred_region
      %s166 = ssub.s32 %s11, 1
      // Predicated region
      $region13: #{basic_block_forward.3} parent=11 // pred_check
        %p167 = pneg %p84
      $region14: #{basic_block_forward.3} parent=11 // pred_check_branch
        %169 = sbr.rel (%p167) target = $region16
      $region15: #{basic_block_forward.3} parent=11 // pred_region
        _
      $region16: #{basic_block_forward.3} parent=11 // pred_fallthru
        _
      // Predicated region
      $region17: #{basic_block_forward.3} parent=11 // pred_check
        %p170 = pneg %p105
      $region18: #{basic_block_forward.3} parent=11 // pred_check_branch
        %172 = sbr.rel (%p170) target = $region20
      $region19: #{basic_block_forward.3} parent=11 // pred_region
        _
      $region20: #{basic_block_forward.3} parent=11 // pred_fallthru
        _
      // Predicated region
      $region21: #{basic_block_forward.3} parent=11 // pred_check
        %p173 = pneg %p126
      $region22: #{basic_block_forward.3} parent=11 // pred_check_branch
        %175 = sbr.rel (%p173) target = $region24
      $region23: #{basic_block_forward.3} parent=11 // pred_region
        _
      $region24: #{basic_block_forward.3} parent=11 // pred_fallthru
        _
    $region12: #{basic_block_forward.3} parent=5 // pred_fallthru
      _
    %p176 = scmp.lt.s32.totalorder %s11, 2
    // Predicated region
    $region25: #{basic_block_forward.3} parent=5 // pred_check
      %p177 = pneg %p176
    $region26: #{basic_block_forward.3} parent=5 // pred_check_branch
      %179 = sbr.rel (%p177) target = $region28
    $region27: #{basic_block_forward.3} parent=5 // pred_region
      // Predicated region
      $region29: #{basic_block_forward.3} parent=27 // pred_check
        %p180 = pneg %p31
      $region30: #{basic_block_forward.3} parent=27 // pred_check_branch
        %182 = sbr.rel (%p180) target = $region32
      $region31: #{basic_block_forward.3} parent=27 // pred_region
        %p183 = scmp.lt.s32.totalorder %s11, 1
        %s184 = scalar_select %p183, %s11, 1
        %s185 = smul.addr %s184, 13
        %s186 = smul.addr %s185, 4
        %s187 = scalar_lea.vmem %s0, %s186
      $region32: #{basic_block_forward.3} parent=27 // pred_fallthru
        _
      // Predicated region
      $region33: #{basic_block_forward.3} parent=27 // pred_check
        %p188 = pneg %p57
      $region34: #{basic_block_forward.3} parent=27 // pred_check_branch
        %190 = sbr.rel (%p188) target = $region36
      $region35: #{basic_block_forward.3} parent=27 // pred_region
        %p191 = scmp.lt.s32.totalorder %s11, 1
        %s192 = scalar_select %p191, %s11, 1
        %s193 = smul.addr %s192, 10
        %s194 = smul.addr %s193, 4
        %s195 = scalar_lea.vmem %s1, %s194
      $region36: #{basic_block_forward.3} parent=27 // pred_fallthru
        _
    $region28: #{basic_block_forward.3} parent=5 // pred_fallthru
      _
    %p196 = scmp.le.s32.totalorder 1, %s11
    %p197 = scmp.lt.s32.totalorder %s11, 3
    %p198 = pnand %p196, %p197
    %p199 = pneg %p198
    // Predicated region
    $region37: #{basic_block_forward.3} parent=5 // pred_check
      _
    $region38: #{basic_block_forward.3} parent=5 // pred_check_branch
      %201 = sbr.rel (%p198) target = $region40
    $region39: #{basic_block_forward.3} parent=5 // pred_region
      %s202 = ssub.s32 %s11, 1
      %p203 = scmp.lt.s32.totalorder %s16, 1
      %s204 = scalar_select %p203, %s16, 1
      %s205 = smul.addr %s204, 13
      %s206 = smul.addr %s205, 4
      %s207 = scalar_lea.vmem %s0, %s206
      %p208 = pneg %p37
      %p209 = pneg %p34
      %p210 = scmp.lt.s32.totalorder %s16, 1
      %s211 = scalar_select %p210, %s16, 1
      %s212 = smul.addr %s211, 10
      %s213 = smul.addr %s212, 4
      %s214 = scalar_lea.vmem %s1, %s213
      %p215 = pneg %p63
      %p216 = pneg %p60
      %p217 = pneg %p84
      %p218 = pneg %p81
      %p219 = pneg %p105
      %p220 = pneg %p102
      %p221 = pneg %p126
      %p222 = pneg %p123
      %p223 = pneg %p152
      %p224 = pneg %p149
      %p225 = scmp.lt.s32.totalorder %s16, 1
      %s226 = scalar_select %p225, %s16, 1
      %s227 = smul.addr %s226, 10
      %s228 = smul.addr %s227, 8
      %s229 = scalar_lea.vmem %s5, %s228
      %p230 = scmp.lt.s32.totalorder %s16, 1
      %s231 = scalar_select %p230, %s16, 1
      %s232 = smul.addr %s231, 13
      %s233 = smul.addr %s232, 4
      %s234 = scalar_lea.vmem %s0, %s233
      %p235 = scmp.lt.s32.totalorder %s16, 1
      %s236 = scalar_select %p235, %s16, 1
      %s237 = smul.addr %s236, 10
      %s238 = smul.addr %s237, 4
      %s239 = scalar_lea.vmem %s1, %s238
      %p240 = scmp.lt.s32.totalorder %s16, 1
      %s241 = scalar_select %p240, %s16, 1
      %s242 = smul.addr %s241, 10
      %s243 = smul.addr %s242, 8
      %s244 = scalar_lea.vmem %s5, %s243
      %v246 = vld [vmem:[%s234] sm:$0xf]
      %v247 = vld [vmem:[%s234 + $0x4] sm:$0xf]
      %v248 = vld [vmem:[%s234 + $0x8] sm:$0xf]
      %v249 = vld [vmem:[%s234 + $0xc] sm:$0xf]
      %v250 = vld [vmem:[%s234 + $0x10] sm:$0xf]
      %v251 = vld [vmem:[%s234 + $0x14] sm:$0xf]
      %v252 = vld [vmem:[%s234 + $0x18] sm:$0xf]
      %v253 = vld [vmem:[%s234 + $0x1c] sm:$0xf]
      %v254 = vld [vmem:[%s234 + $0x20] sm:$0xf]
      %v255 = vld [vmem:[%s234 + $0x24] sm:$0xf]
      %v256 = vld [vmem:[%s2] sm:$0xf]
      %v257 = vld [vmem:[%s234 + $0x28] sm:$0x1]
      %s258 = scalar_lea.vmem %s2, 4
      %v259 = vld [vmem:[%s258] sm:$0xf]
      %v271 = vunpack.c.l.b16 %v246
      %v272 = vunpack.c.l.b16 %v247
      %v273 = vunpack.c.l.b16 %v248
      %v274 = vunpack.c.l.b16 %v249
      %v275 = vunpack.c.l.b16 %v250
      %v276 = vunpack.c.l.b16 %v251
      %v277 = vunpack.c.l.b16 %v252
      %v278 = vunpack.c.l.b16 %v253
      %v279 = vunpack.c.l.b16 %v254
      %v280 = vunpack.c.l.b16 %v255
      %v281 = vunpack.c.l.b16 %v257
      %v282 = vpack.c.b16 %v272, %v271
      %v283 = vpack.c.b16 %v274, %v273
      %v284 = vpack.c.b16 %v276, %v275
      %v285 = vpack.c.b16 %v278, %v277
      %v286 = vpack.c.b16 %v280, %v279
      %v287 = vpack.c.b16 %v281, %v281
      %vm288 = vsmask.f32 7424
      %v290 = vshrl.u32 %v282, 16
      %v292 = vshll.u32 %v282, 16
      %v294 = vrot.slane %v292, 1
      %v295 = vor.u32 %v290, %v294
      %v297 = vshll.u32 %v283, 16
      %v299 = vrot.slane %v297, 1
      %v300 = vsel %vm288, %v295, %v299
      %v301 = vshrl.u32 %v283, 16
      %v303 = vor.u32 %v301, %v299
      %v305 = vshll.u32 %v284, 16
      %v307 = vrot.slane %v305, 1
      %v308 = vsel %vm288, %v303, %v307
      %v309 = vshrl.u32 %v284, 16
      %v311 = vor.u32 %v309, %v307
      %v313 = vshll.u32 %v285, 16
      %v315 = vrot.slane %v313, 1
      %v316 = vsel %vm288, %v311, %v315
      %v317 = vshrl.u32 %v285, 16
      %v319 = vor.u32 %v317, %v315
      %v321 = vshll.u32 %v286, 16
      %v323 = vrot.slane %v321, 1
      %v324 = vsel %vm288, %v319, %v323
      %v325 = vshrl.u32 %v286, 16
      %v327 = vor.u32 %v325, %v323
      %v329 = vshll.u32 %v287, 16
      %v331 = vrot.slane %v329, 1
      %v332 = vsel %vm288, %v327, %v331
      %vm333 = vcmask 64512
      %v335 = vsel %vm333, %v300, 0
      %v338 = vsel %vm333, %v308, 0
      %v341 = vsel %vm333, %v316, 0
      %v344 = vsel %vm333, %v324, 0
      %v347 = vsel %vm333, %v332, 0
      %vm349 = vcmask 1043456
      %v351 = vsel %vm349, %v259, 0
      %353 = vmatpush.bf16.msra.mxu0 0
      %354 = vmatpush.bf16.msra.mxu0 0
      %355 = vmatpush.bf16.msra.mxu0 0
      %356 = vmatpush.bf16.msra.mxu0 0
      %357 = vmatpush.bf16.msra.mxu0 0
      %358 = vmatpush.bf16.msra.mxu0 0
      %359 = vmatpush.bf16.msra.mxu0 0
      %360 = vmatpush.bf16.msra.mxu0 %v351
      %361 = vmatmul.bf16.gmra.mxu0 %v335
      %v362 = vpop.f32.mrf.mxu0
      %v363 = vadd.f32 0.0, %v362
      %v364 = vpop.f32.mrf.mxu0
      %v365 = vadd.f32 0.0, %v364
      %366 = vmatmul.bf16.gmra.mxu0 %v338
      %v367 = vpop.f32.mrf.mxu0
      %v368 = vadd.f32 0.0, %v367
      %v369 = vpop.f32.mrf.mxu0
      %v370 = vadd.f32 0.0, %v369
      %371 = vmatmul.bf16.gmra.mxu0 %v341
      %v372 = vpop.f32.mrf.mxu0
      %v373 = vadd.f32 0.0, %v372
      %v374 = vpop.f32.mrf.mxu0
      %v375 = vadd.f32 0.0, %v374
      %376 = vmatmul.bf16.gmra.mxu0 %v344
      %v377 = vpop.f32.mrf.mxu0
      %v378 = vadd.f32 0.0, %v377
      %v379 = vpop.f32.mrf.mxu0
      %v380 = vadd.f32 0.0, %v379
      %381 = vmatmul.bf16.gmra.mxu0 %v347
      %v382 = vpop.f32.mrf.mxu0
      %v383 = vadd.f32 0.0, %v382
      %v384 = vpop.f32.mrf.mxu0
      %v385 = vadd.f32 0.0, %v384
      %386 = vdwg.mxu0
      %v387 = vsel %vm333, %v282, 0
      %v389 = vsel %vm333, %v283, 0
      %v391 = vsel %vm333, %v284, 0
      %v393 = vsel %vm333, %v285, 0
      %v395 = vsel %vm333, %v286, 0
      %v398 = vsel %vm349, %v256, 0
      %400 = vmatpush.bf16.msra.mxu0 0
      %401 = vmatpush.bf16.msra.mxu0 0
      %402 = vmatpush.bf16.msra.mxu0 0
      %403 = vmatpush.bf16.msra.mxu0 0
      %404 = vmatpush.bf16.msra.mxu0 0
      %405 = vmatpush.bf16.msra.mxu0 0
      %406 = vmatpush.bf16.msra.mxu0 0
      %407 = vmatpush.bf16.msra.mxu0 %v398
      %408 = vmatmul.bf16.gmra.mxu0 %v387
      %v409 = vpop.f32.mrf.mxu0
      %v410 = vadd.f32 %v363, %v409
      %v411 = vpop.f32.mrf.mxu0
      %v412 = vadd.f32 %v365, %v411
      %413 = vmatmul.bf16.gmra.mxu0 %v389
      %v414 = vpop.f32.mrf.mxu0
      %v415 = vadd.f32 %v368, %v414
      %v416 = vpop.f32.mrf.mxu0
      %v417 = vadd.f32 %v370, %v416
      %418 = vmatmul.bf16.gmra.mxu0 %v391
      %v419 = vpop.f32.mrf.mxu0
      %v420 = vadd.f32 %v373, %v419
      %v421 = vpop.f32.mrf.mxu0
      %v422 = vadd.f32 %v375, %v421
      %423 = vmatmul.bf16.gmra.mxu0 %v393
      %v424 = vpop.f32.mrf.mxu0
      %v425 = vadd.f32 %v378, %v424
      %v426 = vpop.f32.mrf.mxu0
      %v427 = vadd.f32 %v380, %v426
      %428 = vmatmul.bf16.gmra.mxu0 %v395
      %v429 = vpop.f32.mrf.mxu0
      %v430 = vadd.f32 %v383, %v429
      %v431 = vpop.f32.mrf.mxu0
      %v432 = vadd.f32 %v385, %v431
      %433 = vdwg.mxu0
      %v434 = vld [vmem:[%s234] sm:$0xe]
      %s435 = scalar_lea.vmem %s2, 8
      %v436 = vld [vmem:[%s435] sm:$0xf]
      %v438 = vunpack.c.l.b16 %v434
      %v439 = vpack.c.b16 %v272, %v438
      %vm440 = vcmask 1046528
      %v441 = vrot.slane %v439, 1
      %v442 = vrot.slane %v283, 1
      %v443 = vsel %vm440, %v441, %v442
      %v444 = vrot.slane %v284, 1
      %v445 = vsel %vm440, %v442, %v444
      %v446 = vrot.slane %v285, 1
      %v447 = vsel %vm440, %v444, %v446
      %v448 = vrot.slane %v286, 1
      %v449 = vsel %vm440, %v446, %v448
      %v450 = vrot.slane %v287, 1
      %v451 = vsel %vm440, %v448, %v450
      %v453 = vsel %vm333, %v443, 0
      %v456 = vsel %vm333, %v445, 0
      %v459 = vsel %vm333, %v447, 0
      %v462 = vsel %vm333, %v449, 0
      %v465 = vsel %vm333, %v451, 0
      %v468 = vsel %vm349, %v436, 0
      %470 = vmatpush.bf16.msra.mxu0 0
      %471 = vmatpush.bf16.msra.mxu0 0
      %472 = vmatpush.bf16.msra.mxu0 0
      %473 = vmatpush.bf16.msra.mxu0 0
      %474 = vmatpush.bf16.msra.mxu0 0
      %475 = vmatpush.bf16.msra.mxu0 0
      %476 = vmatpush.bf16.msra.mxu0 0
      %477 = vmatpush.bf16.msra.mxu0 %v468
      %478 = vmatmul.bf16.gmra.mxu0 %v453
      %v479 = vpop.f32.mrf.mxu0
      %v480 = vadd.f32 0.0, %v479
      %v481 = vpop.f32.mrf.mxu0
      %v482 = vadd.f32 0.0, %v481
      %483 = vmatmul.bf16.gmra.mxu0 %v456
      %v484 = vpop.f32.mrf.mxu0
      %v485 = vadd.f32 0.0, %v484
      %v486 = vpop.f32.mrf.mxu0
      %v487 = vadd.f32 0.0, %v486
      %488 = vmatmul.bf16.gmra.mxu0 %v459
      %v489 = vpop.f32.mrf.mxu0
      %v490 = vadd.f32 0.0, %v489
      %v491 = vpop.f32.mrf.mxu0
      %v492 = vadd.f32 0.0, %v491
      %493 = vmatmul.bf16.gmra.mxu0 %v462
      %v494 = vpop.f32.mrf.mxu0
      %v495 = vadd.f32 0.0, %v494
      %v496 = vpop.f32.mrf.mxu0
      %v497 = vadd.f32 0.0, %v496
      %498 = vmatmul.bf16.gmra.mxu0 %v465
      %v499 = vpop.f32.mrf.mxu0
      %v500 = vadd.f32 0.0, %v499
      %v501 = vpop.f32.mrf.mxu0
      %v502 = vadd.f32 0.0, %v501
      %503 = vdwg.mxu0
      %v504 = vadd.f32 %v410, %v480
      %v505 = vadd.f32 %v412, %v482
      %v506 = vadd.f32 %v415, %v485
      %v507 = vadd.f32 %v417, %v487
      %v508 = vadd.f32 %v420, %v490
      %v509 = vadd.f32 %v422, %v492
      %v510 = vadd.f32 %v425, %v495
      %v511 = vadd.f32 %v427, %v497
      %v512 = vadd.f32 %v430, %v500
      %v513 = vadd.f32 %v432, %v502
      %v514 = vld [vmem:[%s234 + $0x4] sm:$0xe]
      %v515 = vld [vmem:[%s234 + $0x8] sm:$0xf]
      %v516 = vld [vmem:[%s234 + $0xc] sm:$0xf]
      %v517 = vld [vmem:[%s234 + $0x10] sm:$0xf]
      %v518 = vld [vmem:[%s234 + $0x14] sm:$0xf]
      %v519 = vld [vmem:[%s234 + $0x18] sm:$0xf]
      %v520 = vld [vmem:[%s234 + $0x1c] sm:$0xf]
      %v521 = vld [vmem:[%s234 + $0x20] sm:$0xf]
      %v522 = vld [vmem:[%s234 + $0x24] sm:$0xf]
      %v523 = vld [vmem:[%s234 + $0x28] sm:$0xf]
      %v524 = vld [vmem:[%s234 + $0x2c] sm:$0x1]
      %s525 = scalar_lea.vmem %s2, 12
      %v526 = vld [vmem:[%s525] sm:$0xf]
      %v538 = vunpack.c.l.b16 %v514
      %v539 = vunpack.c.l.b16 %v515
      %v540 = vunpack.c.l.b16 %v516
      %v541 = vunpack.c.l.b16 %v517
      %v542 = vunpack.c.l.b16 %v518
      %v543 = vunpack.c.l.b16 %v519
      %v544 = vunpack.c.l.b16 %v520
      %v545 = vunpack.c.l.b16 %v521
      %v546 = vunpack.c.l.b16 %v522
      %v547 = vunpack.c.l.b16 %v523
      %v548 = vunpack.c.l.b16 %v524
      %v549 = vpack.c.b16 %v539, %v538
      %v550 = vpack.c.b16 %v541, %v540
      %v551 = vpack.c.b16 %v543, %v542
      %v552 = vpack.c.b16 %v545, %v544
      %v553 = vpack.c.b16 %v547, %v546
      %v554 = vpack.c.b16 %v548, %v548
      %v555 = vrot.slane %v549, 1
      %v556 = vrot.slane %v550, 1
      %v557 = vsel %vm440, %v555, %v556
      %v558 = vrot.slane %v551, 1
      %v559 = vsel %vm440, %v556, %v558
      %v560 = vrot.slane %v552, 1
      %v561 = vsel %vm440, %v558, %v560
      %v562 = vrot.slane %v553, 1
      %v563 = vsel %vm440, %v560, %v562
      %v564 = vrot.slane %v554, 1
      %v565 = vsel %vm440, %v562, %v564
      %v567 = vsel %vm333, %v557, 0
      %v570 = vsel %vm333, %v559, 0
      %v573 = vsel %vm333, %v561, 0
      %v576 = vsel %vm333, %v563, 0
      %v579 = vsel %vm333, %v565, 0
      %v582 = vsel %vm349, %v526, 0
      %584 = vmatpush.bf16.msra.mxu0 0
      %585 = vmatpush.bf16.msra.mxu0 0
      %586 = vmatpush.bf16.msra.mxu0 0
      %587 = vmatpush.bf16.msra.mxu0 0
      %588 = vmatpush.bf16.msra.mxu0 0
      %589 = vmatpush.bf16.msra.mxu0 0
      %590 = vmatpush.bf16.msra.mxu0 0
      %591 = vmatpush.bf16.msra.mxu0 %v582
      %592 = vmatmul.bf16.gmra.mxu0 %v567
      %v593 = vpop.f32.mrf.mxu0
      %v594 = vadd.f32 0.0, %v593
      %v595 = vpop.f32.mrf.mxu0
      %v596 = vadd.f32 0.0, %v595
      %597 = vmatmul.bf16.gmra.mxu0 %v570
      %v598 = vpop.f32.mrf.mxu0
      %v599 = vadd.f32 0.0, %v598
      %v600 = vpop.f32.mrf.mxu0
      %v601 = vadd.f32 0.0, %v600
      %602 = vmatmul.bf16.gmra.mxu0 %v573
      %v603 = vpop.f32.mrf.mxu0
      %v604 = vadd.f32 0.0, %v603
      %v605 = vpop.f32.mrf.mxu0
      %v606 = vadd.f32 0.0, %v605
      %607 = vmatmul.bf16.gmra.mxu0 %v576
      %v608 = vpop.f32.mrf.mxu0
      %v609 = vadd.f32 0.0, %v608
      %v610 = vpop.f32.mrf.mxu0
      %v611 = vadd.f32 0.0, %v610
      %612 = vmatmul.bf16.gmra.mxu0 %v579
      %v613 = vpop.f32.mrf.mxu0
      %v614 = vadd.f32 0.0, %v613
      %v615 = vpop.f32.mrf.mxu0
      %v616 = vadd.f32 0.0, %v615
      %617 = vdwg.mxu0
      %v618 = vadd.f32 %v504, %v594
      %v619 = vadd.f32 %v505, %v596
      %v620 = vadd.f32 %v506, %v599
      %v621 = vadd.f32 %v507, %v601
      %v622 = vadd.f32 %v508, %v604
      %v623 = vadd.f32 %v509, %v606
      %v624 = vadd.f32 %v510, %v609
      %v625 = vadd.f32 %v511, %v611
      %v626 = vadd.f32 %v512, %v614
      %v627 = vadd.f32 %v513, %v616
      %v628 = vld [vmem:[%s234 + $0x2c] sm:$0x3]
      %s629 = scalar_lea.vmem %s2, 16
      %v630 = vld [vmem:[%s629] sm:$0xf]
      %v632 = vunpack.c.l.b16 %v628
      %v633 = vpack.c.b16 %v632, %v632
      %vm634 = vsmask.f32 6400
      %v636 = vshrl.u32 %v549, 16
      %v638 = vrot.slane %v636, 1
      %v639 = vshll.u32 %v549, 16
      %v641 = vrot.slane %v639, 2
      %v642 = vor.u32 %v638, %v641
      %v644 = vshrl.u32 %v550, 16
      %v646 = vrot.slane %v644, 1
      %v647 = vshll.u32 %v550, 16
      %v649 = vrot.slane %v647, 2
      %v650 = vor.u32 %v646, %v649
      %v651 = vsel %vm634, %v642, %v650
      %v653 = vshrl.u32 %v551, 16
      %v655 = vrot.slane %v653, 1
      %v656 = vshll.u32 %v551, 16
      %v658 = vrot.slane %v656, 2
      %v659 = vor.u32 %v655, %v658
      %v660 = vsel %vm634, %v650, %v659
      %v662 = vshrl.u32 %v552, 16
      %v664 = vrot.slane %v662, 1
      %v665 = vshll.u32 %v552, 16
      %v667 = vrot.slane %v665, 2
      %v668 = vor.u32 %v664, %v667
      %v669 = vsel %vm634, %v659, %v668
      %v671 = vshrl.u32 %v553, 16
      %v673 = vrot.slane %v671, 1
      %v674 = vshll.u32 %v553, 16
      %v676 = vrot.slane %v674, 2
      %v677 = vor.u32 %v673, %v676
      %v678 = vsel %vm634, %v668, %v677
      %v680 = vshrl.u32 %v633, 16
      %v682 = vrot.slane %v680, 1
      %v683 = vshll.u32 %v633, 16
      %v685 = vrot.slane %v683, 2
      %v686 = vor.u32 %v682, %v685
      %v687 = vsel %vm634, %v677, %v686
      %v689 = vsel %vm333, %v651, 0
      %v692 = vsel %vm333, %v660, 0
      %v695 = vsel %vm333, %v669, 0
      %v698 = vsel %vm333, %v678, 0
      %v701 = vsel %vm333, %v687, 0
      %v704 = vsel %vm349, %v630, 0
      %706 = vmatpush.bf16.msra.mxu0 0
      %707 = vmatpush.bf16.msra.mxu0 0
      %708 = vmatpush.bf16.msra.mxu0 0
      %709 = vmatpush.bf16.msra.mxu0 0
      %710 = vmatpush.bf16.msra.mxu0 0
      %711 = vmatpush.bf16.msra.mxu0 0
      %712 = vmatpush.bf16.msra.mxu0 0
      %713 = vmatpush.bf16.msra.mxu0 %v704
      %714 = vmatmul.bf16.gmra.mxu0 %v689
      %v715 = vpop.f32.mrf.mxu0
      %v716 = vadd.f32 0.0, %v715
      %v717 = vpop.f32.mrf.mxu0
      %v718 = vadd.f32 0.0, %v717
      %719 = vmatmul.bf16.gmra.mxu0 %v692
      %v720 = vpop.f32.mrf.mxu0
      %v721 = vadd.f32 0.0, %v720
      %v722 = vpop.f32.mrf.mxu0
      %v723 = vadd.f32 0.0, %v722
      %724 = vmatmul.bf16.gmra.mxu0 %v695
      %v725 = vpop.f32.mrf.mxu0
      %v726 = vadd.f32 0.0, %v725
      %v727 = vpop.f32.mrf.mxu0
      %v728 = vadd.f32 0.0, %v727
      %729 = vmatmul.bf16.gmra.mxu0 %v698
      %v730 = vpop.f32.mrf.mxu0
      %v731 = vadd.f32 0.0, %v730
      %v732 = vpop.f32.mrf.mxu0
      %v733 = vadd.f32 0.0, %v732
      %734 = vmatmul.bf16.gmra.mxu0 %v701
      %v735 = vpop.f32.mrf.mxu0
      %v736 = vadd.f32 0.0, %v735
      %v737 = vpop.f32.mrf.mxu0
      %v738 = vadd.f32 0.0, %v737
      %739 = vdwg.mxu0
      %v740 = vadd.f32 %v618, %v716
      %v741 = vadd.f32 %v619, %v718
      %v742 = vadd.f32 %v620, %v721
      %v743 = vadd.f32 %v621, %v723
      %v744 = vadd.f32 %v622, %v726
      %v745 = vadd.f32 %v623, %v728
      %v746 = vadd.f32 %v624, %v731
      %v747 = vadd.f32 %v625, %v733
      %v748 = vadd.f32 %v626, %v736
      %v749 = vadd.f32 %v627, %v738
      %v750 = vld [vmem:[%s234 + $0x4] sm:$0xc]
      %s751 = scalar_lea.vmem %s2, 20
      %v752 = vld [vmem:[%s751] sm:$0xf]
      %v754 = vunpack.c.l.b16 %v750
      %v755 = vpack.c.b16 %v539, %v754
      %vm756 = vcmask 1045504
      %v757 = vrot.slane %v755, 2
      %v758 = vrot.slane %v550, 2
      %v759 = vsel %vm756, %v757, %v758
      %v760 = vrot.slane %v551, 2
      %v761 = vsel %vm756, %v758, %v760
      %v762 = vrot.slane %v552, 2
      %v763 = vsel %vm756, %v760, %v762
      %v764 = vrot.slane %v553, 2
      %v765 = vsel %vm756, %v762, %v764
      %v766 = vrot.slane %v633, 2
      %v767 = vsel %vm756, %v764, %v766
      %v769 = vsel %vm333, %v759, 0
      %v772 = vsel %vm333, %v761, 0
      %v775 = vsel %vm333, %v763, 0
      %v778 = vsel %vm333, %v765, 0
      %v781 = vsel %vm333, %v767, 0
      %v784 = vsel %vm349, %v752, 0
      %786 = vmatpush.bf16.msra.mxu0 0
      %787 = vmatpush.bf16.msra.mxu0 0
      %788 = vmatpush.bf16.msra.mxu0 0
      %789 = vmatpush.bf16.msra.mxu0 0
      %790 = vmatpush.bf16.msra.mxu0 0
      %791 = vmatpush.bf16.msra.mxu0 0
      %792 = vmatpush.bf16.msra.mxu0 0
      %793 = vmatpush.bf16.msra.mxu0 %v784
      %794 = vmatmul.bf16.gmra.mxu0 %v769
      %v795 = vpop.f32.mrf.mxu0
      %v796 = vadd.f32 0.0, %v795
      %v797 = vpop.f32.mrf.mxu0
      %v798 = vadd.f32 0.0, %v797
      %799 = vmatmul.bf16.gmra.mxu0 %v772
      %v800 = vpop.f32.mrf.mxu0
      %v801 = vadd.f32 0.0, %v800
      %v802 = vpop.f32.mrf.mxu0
      %v803 = vadd.f32 0.0, %v802
      %804 = vmatmul.bf16.gmra.mxu0 %v775
      %v805 = vpop.f32.mrf.mxu0
      %v806 = vadd.f32 0.0, %v805
      %v807 = vpop.f32.mrf.mxu0
      %v808 = vadd.f32 0.0, %v807
      %809 = vmatmul.bf16.gmra.mxu0 %v778
      %v810 = vpop.f32.mrf.mxu0
      %v811 = vadd.f32 0.0, %v810
      %v812 = vpop.f32.mrf.mxu0
      %v813 = vadd.f32 0.0, %v812
      %814 = vmatmul.bf16.gmra.mxu0 %v781
      %v815 = vpop.f32.mrf.mxu0
      %v816 = vadd.f32 0.0, %v815
      %v817 = vpop.f32.mrf.mxu0
      %v818 = vadd.f32 0.0, %v817
      %819 = vdwg.mxu0
      %v820 = vadd.f32 %v740, %v796
      %v821 = vadd.f32 %v741, %v798
      %v822 = vadd.f32 %v742, %v801
      %v823 = vadd.f32 %v743, %v803
      %v824 = vadd.f32 %v744, %v806
      %v825 = vadd.f32 %v745, %v808
      %v826 = vadd.f32 %v746, %v811
      %v827 = vadd.f32 %v747, %v813
      %v828 = vadd.f32 %v748, %v816
      %v829 = vadd.f32 %v749, %v818
      %v830 = vld [vmem:[%s234 + $0x8] sm:$0xc]
      %v831 = vld [vmem:[%s234 + $0xc] sm:$0xf]
      %v832 = vld [vmem:[%s234 + $0x10] sm:$0xf]
      %v833 = vld [vmem:[%s234 + $0x14] sm:$0xf]
      %v834 = vld [vmem:[%s234 + $0x18] sm:$0xf]
      %v835 = vld [vmem:[%s234 + $0x1c] sm:$0xf]
      %v836 = vld [vmem:[%s234 + $0x20] sm:$0xf]
      %v837 = vld [vmem:[%s234 + $0x24] sm:$0xf]
      %v838 = vld [vmem:[%s234 + $0x28] sm:$0xf]
      %v839 = vld [vmem:[%s234 + $0x2c] sm:$0xf]
      %v840 = vld [vmem:[%s234 + $0x30] sm:$0x3]
      %s841 = scalar_lea.vmem %s2, 24
      %v842 = vld [vmem:[%s841] sm:$0xf]
      %v854 = vunpack.c.l.b16 %v830
      %v855 = vunpack.c.l.b16 %v831
      %v856 = vunpack.c.l.b16 %v832
      %v857 = vunpack.c.l.b16 %v833
      %v858 = vunpack.c.l.b16 %v834
      %v859 = vunpack.c.l.b16 %v835
      %v860 = vunpack.c.l.b16 %v836
      %v861 = vunpack.c.l.b16 %v837
      %v862 = vunpack.c.l.b16 %v838
      %v863 = vunpack.c.l.b16 %v839
      %v864 = vunpack.c.l.b16 %v840
      %v865 = vpack.c.b16 %v855, %v854
      %v866 = vpack.c.b16 %v857, %v856
      %v867 = vpack.c.b16 %v859, %v858
      %v868 = vpack.c.b16 %v861, %v860
      %v869 = vpack.c.b16 %v863, %v862
      %v870 = vpack.c.b16 %v864, %v864
      %v871 = vrot.slane %v865, 2
      %v872 = vrot.slane %v866, 2
      %v873 = vsel %vm756, %v871, %v872
      %v874 = vrot.slane %v867, 2
      %v875 = vsel %vm756, %v872, %v874
      %v876 = vrot.slane %v868, 2
      %v877 = vsel %vm756, %v874, %v876
      %v878 = vrot.slane %v869, 2
      %v879 = vsel %vm756, %v876, %v878
      %v880 = vrot.slane %v870, 2
      %v881 = vsel %vm756, %v878, %v880
      %v883 = vsel %vm333, %v873, 0
      %v886 = vsel %vm333, %v875, 0
      %v889 = vsel %vm333, %v877, 0
      %v892 = vsel %vm333, %v879, 0
      %v895 = vsel %vm333, %v881, 0
      %v898 = vsel %vm349, %v842, 0
      %900 = vmatpush.bf16.msra.mxu0 0
      %901 = vmatpush.bf16.msra.mxu0 0
      %902 = vmatpush.bf16.msra.mxu0 0
      %903 = vmatpush.bf16.msra.mxu0 0
      %904 = vmatpush.bf16.msra.mxu0 0
      %905 = vmatpush.bf16.msra.mxu0 0
      %906 = vmatpush.bf16.msra.mxu0 0
      %907 = vmatpush.bf16.msra.mxu0 %v898
      %908 = vmatmul.bf16.gmra.mxu0 %v883
      %v909 = vpop.f32.mrf.mxu0
      %v910 = vadd.f32 0.0, %v909
      %v911 = vpop.f32.mrf.mxu0
      %v912 = vadd.f32 0.0, %v911
      %913 = vmatmul.bf16.gmra.mxu0 %v886
      %v914 = vpop.f32.mrf.mxu0
      %v915 = vadd.f32 0.0, %v914
      %v916 = vpop.f32.mrf.mxu0
      %v917 = vadd.f32 0.0, %v916
      %918 = vmatmul.bf16.gmra.mxu0 %v889
      %v919 = vpop.f32.mrf.mxu0
      %v920 = vadd.f32 0.0, %v919
      %v921 = vpop.f32.mrf.mxu0
      %v922 = vadd.f32 0.0, %v921
      %923 = vmatmul.bf16.gmra.mxu0 %v892
      %v924 = vpop.f32.mrf.mxu0
      %v925 = vadd.f32 0.0, %v924
      %v926 = vpop.f32.mrf.mxu0
      %v927 = vadd.f32 0.0, %v926
      %928 = vmatmul.bf16.gmra.mxu0 %v895
      %v929 = vpop.f32.mrf.mxu0
      %v930 = vadd.f32 0.0, %v929
      %v931 = vpop.f32.mrf.mxu0
      %v932 = vadd.f32 0.0, %v931
      %933 = vdwg.mxu0
      %v934 = vadd.f32 %v820, %v910
      %v935 = vadd.f32 %v821, %v912
      %v936 = vadd.f32 %v822, %v915
      %v937 = vadd.f32 %v823, %v917
      %v938 = vadd.f32 %v824, %v920
      %v939 = vadd.f32 %v825, %v922
      %v940 = vadd.f32 %v826, %v925
      %v941 = vadd.f32 %v827, %v927
      %v942 = vadd.f32 %v828, %v930
      %v943 = vadd.f32 %v829, %v932
      %v944 = vld [vmem:[%s234 + $0x30] sm:$0x7]
      %s945 = scalar_lea.vmem %s2, 28
      %v946 = vld [vmem:[%s945] sm:$0xf]
      %v948 = vunpack.c.l.b16 %v944
      %v949 = vpack.c.b16 %v948, %v948
      %vm950 = vsmask.f32 5376
      %v952 = vshrl.u32 %v865, 16
      %v954 = vrot.slane %v952, 2
      %v955 = vshll.u32 %v865, 16
      %v957 = vrot.slane %v955, 3
      %v958 = vor.u32 %v954, %v957
      %v960 = vshrl.u32 %v866, 16
      %v962 = vrot.slane %v960, 2
      %v963 = vshll.u32 %v866, 16
      %v965 = vrot.slane %v963, 3
      %v966 = vor.u32 %v962, %v965
      %v967 = vsel %vm950, %v958, %v966
      %v969 = vshrl.u32 %v867, 16
      %v971 = vrot.slane %v969, 2
      %v972 = vshll.u32 %v867, 16
      %v974 = vrot.slane %v972, 3
      %v975 = vor.u32 %v971, %v974
      %v976 = vsel %vm950, %v966, %v975
      %v978 = vshrl.u32 %v868, 16
      %v980 = vrot.slane %v978, 2
      %v981 = vshll.u32 %v868, 16
      %v983 = vrot.slane %v981, 3
      %v984 = vor.u32 %v980, %v983
      %v985 = vsel %vm950, %v975, %v984
      %v987 = vshrl.u32 %v869, 16
      %v989 = vrot.slane %v987, 2
      %v990 = vshll.u32 %v869, 16
      %v992 = vrot.slane %v990, 3
      %v993 = vor.u32 %v989, %v992
      %v994 = vsel %vm950, %v984, %v993
      %v996 = vshrl.u32 %v949, 16
      %v998 = vrot.slane %v996, 2
      %v999 = vshll.u32 %v949, 16
      %v1001 = vrot.slane %v999, 3
      %v1002 = vor.u32 %v998, %v1001
      %v1003 = vsel %vm950, %v993, %v1002
      %v1005 = vsel %vm333, %v967, 0
      %v1008 = vsel %vm333, %v976, 0
      %v1011 = vsel %vm333, %v985, 0
      %v1014 = vsel %vm333, %v994, 0
      %v1017 = vsel %vm333, %v1003, 0
      %v1020 = vsel %vm349, %v946, 0
      %1022 = vmatpush.bf16.msra.mxu0 0
      %1023 = vmatpush.bf16.msra.mxu0 0
      %1024 = vmatpush.bf16.msra.mxu0 0
      %1025 = vmatpush.bf16.msra.mxu0 0
      %1026 = vmatpush.bf16.msra.mxu0 0
      %1027 = vmatpush.bf16.msra.mxu0 0
      %1028 = vmatpush.bf16.msra.mxu0 0
      %1029 = vmatpush.bf16.msra.mxu0 %v1020
      %1030 = vmatmul.bf16.gmra.mxu0 %v1005
      %v1031 = vpop.f32.mrf.mxu0
      %v1032 = vadd.f32 0.0, %v1031
      %v1033 = vpop.f32.mrf.mxu0
      %v1034 = vadd.f32 0.0, %v1033
      %1035 = vmatmul.bf16.gmra.mxu0 %v1008
      %v1036 = vpop.f32.mrf.mxu0
      %v1037 = vadd.f32 0.0, %v1036
      %v1038 = vpop.f32.mrf.mxu0
      %v1039 = vadd.f32 0.0, %v1038
      %1040 = vmatmul.bf16.gmra.mxu0 %v1011
      %v1041 = vpop.f32.mrf.mxu0
      %v1042 = vadd.f32 0.0, %v1041
      %v1043 = vpop.f32.mrf.mxu0
      %v1044 = vadd.f32 0.0, %v1043
      %1045 = vmatmul.bf16.gmra.mxu0 %v1014
      %v1046 = vpop.f32.mrf.mxu0
      %v1047 = vadd.f32 0.0, %v1046
      %v1048 = vpop.f32.mrf.mxu0
      %v1049 = vadd.f32 0.0, %v1048
      %1050 = vmatmul.bf16.gmra.mxu0 %v1017
      %v1051 = vpop.f32.mrf.mxu0
      %v1052 = vadd.f32 0.0, %v1051
      %v1053 = vpop.f32.mrf.mxu0
      %v1054 = vadd.f32 0.0, %v1053
      %1055 = vdwg.mxu0
      %v1056 = vadd.f32 %v934, %v1032
      %v1057 = vadd.f32 %v935, %v1034
      %v1058 = vadd.f32 %v936, %v1037
      %v1059 = vadd.f32 %v937, %v1039
      %v1060 = vadd.f32 %v938, %v1042
      %v1061 = vadd.f32 %v939, %v1044
      %v1062 = vadd.f32 %v940, %v1047
      %v1063 = vadd.f32 %v941, %v1049
      %v1064 = vadd.f32 %v942, %v1052
      %v1065 = vadd.f32 %v943, %v1054
      %v1066 = vld [vmem:[%s234 + $0x8] sm:$0x8]
      %s1067 = scalar_lea.vmem %s2, 32
      %v1068 = vld [vmem:[%s1067] sm:$0xf]
      %v1070 = vunpack.c.l.b16 %v1066
      %v1071 = vpack.c.b16 %v855, %v1070
      %vm1072 = vcmask 1044480
      %v1073 = vrot.slane %v1071, 3
      %v1074 = vrot.slane %v866, 3
      %v1075 = vsel %vm1072, %v1073, %v1074
      %v1076 = vrot.slane %v867, 3
      %v1077 = vsel %vm1072, %v1074, %v1076
      %v1078 = vrot.slane %v868, 3
      %v1079 = vsel %vm1072, %v1076, %v1078
      %v1080 = vrot.slane %v869, 3
      %v1081 = vsel %vm1072, %v1078, %v1080
      %v1082 = vrot.slane %v949, 3
      %v1083 = vsel %vm1072, %v1080, %v1082
      %v1085 = vsel %vm333, %v1075, 0
      %v1088 = vsel %vm333, %v1077, 0
      %v1091 = vsel %vm333, %v1079, 0
      %v1094 = vsel %vm333, %v1081, 0
      %v1097 = vsel %vm333, %v1083, 0
      %v1100 = vsel %vm349, %v1068, 0
      %1102 = vmatpush.bf16.msra.mxu0 0
      %1103 = vmatpush.bf16.msra.mxu0 0
      %1104 = vmatpush.bf16.msra.mxu0 0
      %1105 = vmatpush.bf16.msra.mxu0 0
      %1106 = vmatpush.bf16.msra.mxu0 0
      %1107 = vmatpush.bf16.msra.mxu0 0
      %1108 = vmatpush.bf16.msra.mxu0 0
      %1109 = vmatpush.bf16.msra.mxu0 %v1100
      %1110 = vmatmul.bf16.gmra.mxu0 %v1085
      %v1111 = vpop.f32.mrf.mxu0
      %v1112 = vadd.f32 0.0, %v1111
      %v1113 = vpop.f32.mrf.mxu0
      %v1114 = vadd.f32 0.0, %v1113
      %1115 = vmatmul.bf16.gmra.mxu0 %v1088
      %v1116 = vpop.f32.mrf.mxu0
      %v1117 = vadd.f32 0.0, %v1116
      %v1118 = vpop.f32.mrf.mxu0
      %v1119 = vadd.f32 0.0, %v1118
      %1120 = vmatmul.bf16.gmra.mxu0 %v1091
      %v1121 = vpop.f32.mrf.mxu0
      %v1122 = vadd.f32 0.0, %v1121
      %v1123 = vpop.f32.mrf.mxu0
      %v1124 = vadd.f32 0.0, %v1123
      %1125 = vmatmul.bf16.gmra.mxu0 %v1094
      %v1126 = vpop.f32.mrf.mxu0
      %v1127 = vadd.f32 0.0, %v1126
      %v1128 = vpop.f32.mrf.mxu0
      %v1129 = vadd.f32 0.0, %v1128
      %1130 = vmatmul.bf16.gmra.mxu0 %v1097
      %v1131 = vpop.f32.mrf.mxu0
      %v1132 = vadd.f32 0.0, %v1131
      %v1133 = vpop.f32.mrf.mxu0
      %v1134 = vadd.f32 0.0, %v1133
      %1135 = vdwg.mxu0
      %v1136 = vadd.f32 %v1056, %v1112
      %v1137 = vadd.f32 %v1057, %v1114
      %v1138 = vadd.f32 %v1058, %v1117
      %v1139 = vadd.f32 %v1059, %v1119
      %v1140 = vadd.f32 %v1060, %v1122
      %v1141 = vadd.f32 %v1061, %v1124
      %v1142 = vadd.f32 %v1062, %v1127
      %v1143 = vadd.f32 %v1063, %v1129
      %v1144 = vadd.f32 %v1064, %v1132
      %v1145 = vadd.f32 %v1065, %v1134
      %v1146 = vld [vmem:[%s239] sm:$0xf]
      %v1147 = vld [vmem:[%s239 + $0x4] sm:$0xf]
      %v1148 = vld [vmem:[%s239 + $0x8] sm:$0xf]
      %v1149 = vld [vmem:[%s239 + $0xc] sm:$0xf]
      %v1150 = vld [vmem:[%s239 + $0x10] sm:$0xf]
      %v1151 = vld [vmem:[%s239 + $0x14] sm:$0xf]
      %v1152 = vld [vmem:[%s239 + $0x18] sm:$0xf]
      %v1153 = vld [vmem:[%s239 + $0x1c] sm:$0xf]
      %v1154 = vld [vmem:[%s239 + $0x20] sm:$0xf]
      %v1155 = vld [vmem:[%s239 + $0x24] sm:$0xf]
      %v1156 = vld [vmem:[%s3] sm:$0x3]
      %v1167 = vunpack.c.l.b16 %v1146
      %v1168 = vunpack.c.l.b16 %v1147
      %v1169 = vunpack.c.l.b16 %v1148
      %v1170 = vunpack.c.l.b16 %v1149
      %v1171 = vunpack.c.l.b16 %v1150
      %v1172 = vunpack.c.l.b16 %v1151
      %v1173 = vunpack.c.l.b16 %v1152
      %v1174 = vunpack.c.l.b16 %v1153
      %v1175 = vunpack.c.l.b16 %v1154
      %v1176 = vunpack.c.l.b16 %v1155
      %v1177 = vpack.c.b16 %v1168, %v1167
      %v1178 = vpack.c.b16 %v1170, %v1169
      %v1179 = vpack.c.b16 %v1172, %v1171
      %v1180 = vpack.c.b16 %v1174, %v1173
      %v1181 = vpack.c.b16 %v1176, %v1175
      %vm1182 = vcmask 31744
      %v1184 = vsel %vm1182, %v1177, 0
      %v1187 = vsel %vm1182, %v1178, 0
      %v1190 = vsel %vm1182, %v1179, 0
      %v1193 = vsel %vm1182, %v1180, 0
      %v1196 = vsel %vm1182, %v1181, 0
      %vm1198 = vcmask 1041408
      %v1200 = vsel %vm1198, %v1156, 0
      %1202 = vmatpush.bf16.msra.mxu0 0
      %1203 = vmatpush.bf16.msra.mxu0 0
      %1204 = vmatpush.bf16.msra.mxu0 0
      %1205 = vmatpush.bf16.msra.mxu0 0
      %1206 = vmatpush.bf16.msra.mxu0 0
      %1207 = vmatpush.bf16.msra.mxu0 0
      %1208 = vmatpush.bf16.msra.mxu0 0
      %1209 = vmatpush.bf16.msra.mxu0 %v1200
      %1210 = vmatmul.bf16.gmra.mxu0 %v1184
      %v1211 = vpop.f32.mrf.mxu0
      %v1212 = vadd.f32 0.0, %v1211
      %v1213 = vpop.f32.mrf.mxu0
      %v1214 = vadd.f32 0.0, %v1213
      %1215 = vmatmul.bf16.gmra.mxu0 %v1187
      %v1216 = vpop.f32.mrf.mxu0
      %v1217 = vadd.f32 0.0, %v1216
      %v1218 = vpop.f32.mrf.mxu0
      %v1219 = vadd.f32 0.0, %v1218
      %1220 = vmatmul.bf16.gmra.mxu0 %v1190
      %v1221 = vpop.f32.mrf.mxu0
      %v1222 = vadd.f32 0.0, %v1221
      %v1223 = vpop.f32.mrf.mxu0
      %v1224 = vadd.f32 0.0, %v1223
      %1225 = vmatmul.bf16.gmra.mxu0 %v1193
      %v1226 = vpop.f32.mrf.mxu0
      %v1227 = vadd.f32 0.0, %v1226
      %v1228 = vpop.f32.mrf.mxu0
      %v1229 = vadd.f32 0.0, %v1228
      %1230 = vmatmul.bf16.gmra.mxu0 %v1196
      %v1231 = vpop.f32.mrf.mxu0
      %v1232 = vadd.f32 0.0, %v1231
      %v1233 = vpop.f32.mrf.mxu0
      %v1234 = vadd.f32 0.0, %v1233
      %1235 = vdwg.mxu0
      %v1236 = vadd.f32 %v1136, %v1212
      %v1237 = vadd.f32 %v1137, %v1214
      %v1238 = vadd.f32 %v1138, %v1217
      %v1239 = vadd.f32 %v1139, %v1219
      %v1240 = vadd.f32 %v1140, %v1222
      %v1241 = vadd.f32 %v1141, %v1224
      %v1242 = vadd.f32 %v1142, %v1227
      %v1243 = vadd.f32 %v1143, %v1229
      %v1244 = vadd.f32 %v1144, %v1232
      %v1245 = vadd.f32 %v1145, %v1234
      %v1246 = vld [vmem:[%s4] sm:$0x1]
      %v1248 = vperm.slane %v1246, 0
      %v1250 = vadd.f32 %v1236, %v1248
      %v1251 = vadd.f32 %v1237, %v1248
      %v1252 = vadd.f32 %v1238, %v1248
      %v1253 = vadd.f32 %v1239, %v1248
      %v1254 = vadd.f32 %v1240, %v1248
      %v1255 = vadd.f32 %v1241, %v1248
      %v1256 = vadd.f32 %v1242, %v1248
      %v1257 = vadd.f32 %v1243, %v1248
      %v1258 = vadd.f32 %v1244, %v1248
      %v1259 = vadd.f32 %v1245, %v1248
      %v1260 = vmax.f32 %v1250, 0.0
      %v1261 = vmax.f32 %v1251, 0.0
      %v1262 = vmax.f32 %v1252, 0.0
      %v1263 = vmax.f32 %v1253, 0.0
      %v1264 = vmax.f32 %v1254, 0.0
      %v1265 = vmax.f32 %v1255, 0.0
      %v1266 = vmax.f32 %v1256, 0.0
      %v1267 = vmax.f32 %v1257, 0.0
      %v1268 = vmax.f32 %v1258, 0.0
      %v1269 = vmax.f32 %v1259, 0.0
      %1270 = vst [vmem:[%s244] sm:$0xff] %v1260
      %1271 = vst [vmem:[%s244 + $0x8] sm:$0xff] %v1261
      %1272 = vst [vmem:[%s244 + $0x10] sm:$0xff] %v1262
      %1273 = vst [vmem:[%s244 + $0x18] sm:$0xff] %v1263
      %1274 = vst [vmem:[%s244 + $0x20] sm:$0xff] %v1264
      %1275 = vst [vmem:[%s244 + $0x28] sm:$0xff] %v1265
      %1276 = vst [vmem:[%s244 + $0x30] sm:$0xff] %v1266
      %1277 = vst [vmem:[%s244 + $0x38] sm:$0xff] %v1267
      %1278 = vst [vmem:[%s244 + $0x40] sm:$0xff] %v1268
      %1279 = vst [vmem:[%s244 + $0x48] sm:$0xff] %v1269
      %p1280 = scmp.lt.s32.totalorder %s16, 1
      %s1281 = scalar_select %p1280, %s16, 1
      %s1282 = smul.addr %s1281, 10
      %s1283 = smul.addr %s1282, 8
      %s1284 = scalar_lea.vmem %s5, %s1283
      // Predicated region
      $region41: #{basic_block_forward.3} parent=39 // pred_check
        %p1285 = pneg %p149
      $region42: #{basic_block_forward.3} parent=39 // pred_check_branch
        %1287 = sbr.rel (%p1285) target = $region44
      $region43: #{basic_block_forward.3} parent=39 // pred_region
        _
      $region44: #{basic_block_forward.3} parent=39 // pred_fallthru
        _
    $region40: #{basic_block_forward.3} parent=5 // pred_fallthru
      _
    %p1288 = scmp.le.s32.totalorder 2, %s11
    // Predicated region
    $region45: #{basic_block_forward.3} parent=5 // pred_check
      %p1289 = pneg %p1288
    $region46: #{basic_block_forward.3} parent=5 // pred_check_branch
      %1291 = sbr.rel (%p1289) target = $region48
    $region47: #{basic_block_forward.3} parent=5 // pred_region
      %s1292 = ssub.s32 %s11, 2
      // Predicated region
      $region49: #{basic_block_forward.3} parent=47 // pred_check
        %p1293 = pneg %p155
      $region50: #{basic_block_forward.3} parent=47 // pred_check_branch
        %1295 = sbr.rel (%p1293) target = $region52
      $region51: #{basic_block_forward.3} parent=47 // pred_region
        %p1296 = scmp.lt.s32.totalorder %s17, 1
        %s1297 = scalar_select %p1296, %s17, 1
        %s1298 = smul.addr %s1297, 10
        %s1299 = smul.addr %s1298, 8
        %s1300 = scalar_lea.vmem %s5, %s1299
      $region52: #{basic_block_forward.3} parent=47 // pred_fallthru
        _
    $region48: #{basic_block_forward.3} parent=5 // pred_fallthru
      _
  $region6: #{basic_block_forward.3} parent=0 // loop_footer
    %s15 = sadd.s32 1, %s11
  $region7: #{basic_block_forward.3} parent=0 // loop_footer_branch
    %10 = sbr.rel target = $region3
  $region8: #{basic_block_forward.3} parent=0 // loop_exit
    _

</llo_original>
